<compile_context>
chip_gen: v5e
topology: v5e:2x2
jax: 0.10.0
libtpu: 0.0.40
codegen_flags: <defaults>
</compile_context>

<pallas_src>
import math

import jax
import jax.numpy as jnp
from jax.experimental import pallas as pl
from jax.experimental.pallas import tpu as pltpu  # noqa: F401  (TPU backend)

# ----------------------------- small DistilBERT config ----------------------
VOCAB = 100
MAX_POS = 16
HIDDEN = 32
N_HEADS = 4
HEAD_DIM = HIDDEN // N_HEADS
FFN = 64
N_LAYERS = 2
NUM_LABELS = 2          # task != mnli / stsb  -> 2 labels
BATCH = 2
SEQ = 8
BS = BATCH * SEQ
LN_EPS = 1e-12
LANE = 128

assert SEQ & (SEQ - 1) == 0, "SEQ must be a power of two (block-mask uses bitwise AND)"

# ---- static slab layout (STATIC_ROWS, 128) f32 ----
R_WORD = 0                      # word_emb, rows [0:128) (padded vocab), cols [0:H)
R_POS = LANE                    # pos_emb,  rows [128:144), cols [0:H)
R_CLS_W = R_POS + MAX_POS       # 144: classifier weight padded to (H, 128)
R_CLS_B = R_CLS_W + HIDDEN      # 176: classifier bias padded to (1, 128)
STATIC_ROWS = 184
C_MISC = HIDDEN                 # misc column band [32:64)
R_PRE_W = 0                     # pre_classifier weight rows [0:32) of misc band
R_PRE_B = HIDDEN                # 32
R_EMB_G = HIDDEN + 1            # 33: embedding LayerNorm gamma
R_EMB_B = HIDDEN + 2            # 34: embedding LayerNorm beta

# ---- per-layer vector slab rows (N_LAYERS, 8, 128) ----
V_QKV_B, V_O_B, V_LN1_G, V_LN1_B, V_F1_B, V_F2_B, V_LN2_G, V_LN2_B = range(8)


# ----------------------------- fused Pallas kernel --------------------------
def _layernorm(x, g, b):
    mean = jnp.mean(x, axis=-1, keepdims=True)
    var = jnp.mean(jnp.square(x - mean), axis=-1, keepdims=True)
    return (x - mean) * jax.lax.rsqrt(var + LN_EPS) * g + b


def _distilbert_kernel(ids_ref, keep_ref, lw_ref, lv_ref, st_ref, out_ref):
    f32 = jnp.float32

    # ---- embedding lookup: one-hot matmul against the padded word table ----
    ids = ids_ref[...]                                                  # (BS, 1) int32
    col = jax.lax.broadcasted_iota(jnp.int32, (BS, LANE), 1)
    onehot = (col == ids).astype(f32)                                   # (BS, 128)
    word = jnp.dot(onehot, st_ref[R_WORD:R_WORD + LANE, 0:HIDDEN],
                   preferred_element_type=f32)                          # (BS, H)
    pos = st_ref[R_POS:R_POS + SEQ, 0:HIDDEN]                           # (S, H)
    x = word + jnp.concatenate([pos] * BATCH, axis=0)                   # (BS, H)

    # ---- embedding LayerNorm (dropout = identity) ----
    x = _layernorm(x,
                   st_ref[R_EMB_G:R_EMB_G + 1, C_MISC:C_MISC + HIDDEN],
                   st_ref[R_EMB_B:R_EMB_B + 1, C_MISC:C_MISC + HIDDEN])

    # ---- attention bias, built ONCE: same-batch block mask * key padding mask ----
    # Batch is folded into the row axis, so scores are (BS, BS); cross-batch blocks and
    # padded keys get -1e9.  bitwise_and(r, -SEQ) == r - r % SEQ since SEQ is pow2.
    rq = jax.lax.broadcasted_iota(jnp.int32, (BS, BS), 0)
    rk = jax.lax.broadcasted_iota(jnp.int32, (BS, BS), 1)
    same_blk = jnp.bitwise_and(rq, -SEQ) == jnp.bitwise_and(rk, -SEQ)
    keep = jnp.where(same_blk, keep_ref[...], 0.0)                      # (BS, BS)
    bias = (keep - 1.0) * f32(1e9)

    for l in range(N_LAYERS):
        # ---- fused QKV projection (1/sqrt(Dh) already folded into Q weights/bias) ----
        qkv = jnp.dot(x, lw_ref[l, 0:HIDDEN, 0:3 * HIDDEN],
                      preferred_element_type=f32) \
            + lv_ref[l, V_QKV_B:V_QKV_B + 1, 0:3 * HIDDEN]              # (BS, 3H)

        # ---- multi-head self attention: two 2-D matmuls per head, one o-proj ----
        ctx_heads = []
        for h in range(N_HEADS):
            sl = slice(h * HEAD_DIM, (h + 1) * HEAD_DIM)
            q_h = qkv[:, sl]                                            # (BS, Dh)
            k_h = qkv[:, HIDDEN + h * HEAD_DIM:HIDDEN + (h + 1) * HEAD_DIM]
            v_h = qkv[:, 2 * HIDDEN + h * HEAD_DIM:2 * HIDDEN + (h + 1) * HEAD_DIM]
            # scores: q @ k^T via dot_general contracting on the last dims (no transpose)
            s = jax.lax.dot_general(q_h, k_h, (((1,), (1,)), ((), ())),
                                    preferred_element_type=f32)         # (BS, BS)
            s = s + bias
            m = jnp.max(s, axis=-1, keepdims=True)
            p = jnp.exp(s - m)
            p = p * pl.reciprocal(jnp.sum(p, axis=-1, keepdims=True), approx=True)
            ctx_heads.append(jnp.dot(p, v_h, preferred_element_type=f32))  # (BS, Dh)
        ctx = jnp.concatenate(ctx_heads, axis=-1)                       # (BS, H)

        attn = jnp.dot(ctx, lw_ref[l, 0:HIDDEN, 96:128],
                       preferred_element_type=f32) \
             + lv_ref[l, V_O_B:V_O_B + 1, 0:HIDDEN]

        # ---- residual + sa_layer_norm ----
        x = _layernorm(attn + x,
                       lv_ref[l, V_LN1_G:V_LN1_G + 1, 0:HIDDEN],
                       lv_ref[l, V_LN1_B:V_LN1_B + 1, 0:HIDDEN])

        # ---- feed-forward: GELU(x W1 + b1) W2 + b2, residual + output_layer_norm ----
        h1 = jnp.dot(x, lw_ref[l, HIDDEN:2 * HIDDEN, 0:FFN],
                     preferred_element_type=f32) \
           + lv_ref[l, V_F1_B:V_F1_B + 1, 0:FFN]
        h1 = jax.nn.gelu(h1, approximate=True)     # tanh GELU -> EUP slot
        h2 = jnp.dot(h1, lw_ref[l, HIDDEN:HIDDEN + FFN, 64:64 + HIDDEN],
                     preferred_element_type=f32) \
           + lv_ref[l, V_F2_B:V_F2_B + 1, 0:HIDDEN]
        x = _layernorm(h2 + x,
                       lv_ref[l, V_LN2_G:V_LN2_G + 1, 0:HIDDEN],
                       lv_ref[l, V_LN2_B:V_LN2_B + 1, 0:HIDDEN])

    # ---- classification head on [CLS] (token 0), dropout = identity ----
    cls = x.reshape(BATCH, SEQ, HIDDEN)[:, 0, :]                        # (B, H)
    pre = jnp.dot(cls, st_ref[R_PRE_W:R_PRE_W + HIDDEN, C_MISC:C_MISC + HIDDEN],
                  preferred_element_type=f32) \
        + st_ref[R_PRE_B:R_PRE_B + 1, C_MISC:C_MISC + HIDDEN]
    pre = jnp.maximum(pre, 0.0)                                         # ReLU
    # lane-dense (B, 128) logits: cls_w / cls_b are zero-padded to 128 columns
    logits = jnp.dot(pre, st_ref[R_CLS_W:R_CLS_W + HIDDEN, :],
                     preferred_element_type=f32) \
           + st_ref[R_CLS_B:R_CLS_B + 1, :]
    out_ref[...] = logits.astype(out_ref.dtype)


def _full_spec(shape):
    zeros = (0,) * len(shape)
    return pl.BlockSpec(shape, lambda *_: zeros)


# ----------------------------- parameter construction -----------------------
def _dense(key, fan_in, fan_out):
    w = jax.random.normal(key, (fan_in, fan_out), jnp.float32) * 0.02
    b = jnp.zeros((fan_out,), jnp.float32)
    return w, b


def init_packed_params(key):
    """Synthetic DistilBERT weights packed into three DMA-friendly slabs."""
    keys = jax.random.split(key, 4 + N_LAYERS)
    word_emb = jax.random.normal(keys[0], (VOCAB, HIDDEN), jnp.float32) * 0.02
    pos_emb = jax.random.normal(keys[1], (MAX_POS, HIDDEN), jnp.float32) * 0.02

    layer_w = jnp.zeros((N_LAYERS, 96, LANE), jnp.float32)
    layer_v = jnp.zeros((N_LAYERS, 8, LANE), jnp.float32)
    scale = 1.0 / math.sqrt(HEAD_DIM)
    ones_h = jnp.ones((HIDDEN,), jnp.float32)
    for l in range(N_LAYERS):
        lk = jax.random.split(keys[2 + l], 6)
        qw, qb = _dense(lk[0], HIDDEN, HIDDEN)
        kw, kb = _dense(lk[1], HIDDEN, HIDDEN)
        vw, vb = _dense(lk[2], HIDDEN, HIDDEN)
        ow, ob = _dense(lk[3], HIDDEN, HIDDEN)
        w1, b1 = _dense(lk[4], HIDDEN, FFN)
        w2, b2 = _dense(lk[5], FFN, HIDDEN)
        # fused QKV with attention scale folded into the Q columns / bias
        qkv_w = jnp.concatenate([qw * scale, kw, vw], axis=1)          # (H, 3H)
        qkv_b = jnp.concatenate([qb * scale, kb, vb], axis=0)          # (3H,)
        layer_w = layer_w.at[l, 0:HIDDEN, 0:3 * HIDDEN].set(qkv_w)
        layer_w = layer_w.at[l, 0:HIDDEN, 96:128].set(ow)
        layer_w = layer_w.at[l, HIDDEN:2 * HIDDEN, 0:FFN].set(w1)
        layer_w = layer_w.at[l, HIDDEN:HIDDEN + FFN, 64:64 + HIDDEN].set(w2)
        layer_v = layer_v.at[l, V_QKV_B, 0:3 * HIDDEN].set(qkv_b)
        layer_v = layer_v.at[l, V_O_B, 0:HIDDEN].set(ob)
        layer_v = layer_v.at[l, V_LN1_G, 0:HIDDEN].set(ones_h)          # gamma=1, beta=0
        layer_v = layer_v.at[l, V_F1_B, 0:FFN].set(b1)
        layer_v = layer_v.at[l, V_F2_B, 0:HIDDEN].set(b2)
        layer_v = layer_v.at[l, V_LN2_G, 0:HIDDEN].set(ones_h)

    static = jnp.zeros((STATIC_ROWS, LANE), jnp.float32)
    static = static.at[R_WORD:R_WORD + VOCAB, 0:HIDDEN].set(word_emb)
    static = static.at[R_POS:R_POS + MAX_POS, 0:HIDDEN].set(pos_emb)
    pk1, pk2 = jax.random.split(keys[2 + N_LAYERS])
    pre_w, pre_b = _dense(pk1, HIDDEN, HIDDEN)
    cls_w, cls_b = _dense(pk2, HIDDEN, NUM_LABELS)
    static = static.at[R_PRE_W:R_PRE_W + HIDDEN, C_MISC:C_MISC + HIDDEN].set(pre_w)
    static = static.at[R_PRE_B, C_MISC:C_MISC + HIDDEN].set(pre_b)
    static = static.at[R_EMB_G, C_MISC:C_MISC + HIDDEN].set(ones_h)     # emb LN gamma
    static = static.at[R_CLS_W:R_CLS_W + HIDDEN, 0:NUM_LABELS].set(cls_w)
    static = static.at[R_CLS_B, 0:NUM_LABELS].set(cls_b)
    return {"layer_w": layer_w, "layer_v": layer_v, "static": static}


# ----------------------------- forward pass ----------------------------------
@jax.jit
def distilled_model_forward(packed, input_ids, attention_mask):
    """Returns classification logits (B, NUM_LABELS) — the `.logits` of the HF output."""
    B, S = input_ids.shape
    ids = input_ids.reshape(B * S, 1).astype(jnp.int32)           # tokens on sublanes
    keep = attention_mask.astype(jnp.float32).reshape(1, B * S)   # keys on lanes
    inputs = [ids, keep, packed["layer_w"], packed["layer_v"], packed["static"]]
    padded = pl.pallas_call(
        _distilbert_kernel,
        out_shape=jax.ShapeDtypeStruct((B, LANE), jnp.float32),
        in_specs=[_full_spec(a.shape) for a in inputs],
        out_specs=_full_spec((B, LANE)),
    )(*inputs)
    return padded[:, :NUM_LABELS]


# ----------------------------- main ------------------------------------------
if __name__ == "__main__":
    key = jax.random.PRNGKey(0)
    k_param, k_ids = jax.random.split(key)
    packed = init_packed_params(k_param)

    input_ids = jax.random.randint(k_ids, (BATCH, SEQ), 0, VOCAB, dtype=jnp.int32)
    attention_mask = jnp.ones((BATCH, SEQ), dtype=jnp.int32)

    logits = distilled_model_forward(packed, input_ids, attention_mask)
    logits = jax.block_until_ready(logits)
    assert logits.shape == (BATCH, NUM_LABELS)
    assert bool(jnp.all(jnp.isfinite(logits)))
    print("KERNEL_OK")
</pallas_src>

<mosaic_0001>
module attributes {stable_mosaic.version = 11 : i64} {
  func.func @_distilbert_kernel(%arg0: memref<16x1xi32, #tpu.memory_space<vmem>>, %arg1: memref<1x16xf32, #tpu.memory_space<vmem>>, %arg2: memref<2x96x128xf32, #tpu.memory_space<vmem>>, %arg3: memref<2x8x128xf32, #tpu.memory_space<vmem>>, %arg4: memref<184x128xf32, #tpu.memory_space<vmem>>, %arg5: memref<2x128xf32, #tpu.memory_space<vmem>>) attributes {dimension_semantics = [], scalar_prefetch = 0 : i64, scratch_operands = 0 : i64, tpu.core_type = #tpu.core_type<tc>} {
    %c0 = arith.constant 0 : index
    %c0_0 = arith.constant 0 : index
    %0 = vector.load %arg0[%c0, %c0_0] : memref<16x1xi32, #tpu.memory_space<vmem>>, vector<16x1xi32>
    %1 = tpu.iota {dimensions = array<i32: 1>} : vector<16x128xi32>
    %2 = vector.broadcast %0 : vector<16x1xi32> to vector<16x128xi32>
    %3 = arith.cmpi eq, %1, %2 : vector<16x128xi32>
    %4 = arith.extui %3 : vector<16x128xi1> to vector<16x128xi32>
    %5 = arith.sitofp %4 : vector<16x128xi32> to vector<16x128xf32>
    %c0_1 = arith.constant 0 : index
    %c0_2 = arith.constant 0 : index
    %6 = vector.load %arg4[%c0_1, %c0_2] : memref<184x128xf32, #tpu.memory_space<vmem>>, vector<128x32xf32>
    %cst = arith.constant dense<0.000000e+00> : vector<16x32xf32>
    %7 = tpu.matmul %5, %6, %cst {dimension_numbers = #tpu.dot_dimension_numbers<[1], [0], [0], [1], [0, 0, 1, 1], [], []>} : vector<16x128xf32>, vector<128x32xf32>, vector<16x32xf32> -> vector<16x32xf32>
    %c128 = arith.constant 128 : index
    %c0_3 = arith.constant 0 : index
    %8 = vector.load %arg4[%c128, %c0_3] : memref<184x128xf32, #tpu.memory_space<vmem>>, vector<8x32xf32>
    %9 = tpu.concatenate %8, %8 in 0 : vector<8x32xf32>, vector<8x32xf32> -> vector<16x32xf32>
    %10 = arith.addf %7, %9 : vector<16x32xf32>
    %c33 = arith.constant 33 : index
    %c32 = arith.constant 32 : index
    %11 = vector.load %arg4[%c33, %c32] : memref<184x128xf32, #tpu.memory_space<vmem>>, vector<1x32xf32>
    %c34 = arith.constant 34 : index
    %c32_4 = arith.constant 32 : index
    %12 = vector.load %arg4[%c34, %c32_4] : memref<184x128xf32, #tpu.memory_space<vmem>>, vector<1x32xf32>
    %cst_5 = arith.constant dense<0.000000e+00> : vector<16xf32>
    %13 = vector.multi_reduction <add>, %10, %cst_5 [1] : vector<16x32xf32> to vector<16xf32>
    %14 = vector.shape_cast %13 : vector<16xf32> to vector<16x1xf32>
    %cst_6 = arith.constant 3.200000e+01 : f32
    %15 = vector.broadcast %cst_6 : f32 to vector<16x1xf32>
    %16 = arith.divf %14, %15 : vector<16x1xf32>
    %17 = vector.broadcast %16 : vector<16x1xf32> to vector<16x32xf32>
    %18 = arith.subf %10, %17 : vector<16x32xf32>
    %19 = arith.mulf %18, %18 : vector<16x32xf32>
    %cst_7 = arith.constant dense<0.000000e+00> : vector<16xf32>
    %20 = vector.multi_reduction <add>, %19, %cst_7 [1] : vector<16x32xf32> to vector<16xf32>
    %21 = vector.shape_cast %20 : vector<16xf32> to vector<16x1xf32>
    %cst_8 = arith.constant 3.200000e+01 : f32
    %22 = vector.broadcast %cst_8 : f32 to vector<16x1xf32>
    %23 = arith.divf %21, %22 : vector<16x1xf32>
    %24 = vector.broadcast %16 : vector<16x1xf32> to vector<16x32xf32>
    %25 = arith.subf %10, %24 : vector<16x32xf32>
    %cst_9 = arith.constant 9.99999996E-13 : f32
    %26 = vector.broadcast %cst_9 : f32 to vector<16x1xf32>
    %27 = arith.addf %23, %26 : vector<16x1xf32>
    %28 = math.rsqrt %27 : vector<16x1xf32>
    %29 = vector.broadcast %28 : vector<16x1xf32> to vector<16x32xf32>
    %30 = arith.mulf %25, %29 : vector<16x32xf32>
    %31 = vector.broadcast %11 : vector<1x32xf32> to vector<16x32xf32>
    %32 = arith.mulf %30, %31 : vector<16x32xf32>
    %33 = vector.broadcast %12 : vector<1x32xf32> to vector<16x32xf32>
    %34 = arith.addf %32, %33 : vector<16x32xf32>
    %35 = tpu.iota {dimensions = array<i32: 0>} : vector<16x16xi32>
    %36 = tpu.iota {dimensions = array<i32: 1>} : vector<16x16xi32>
    %c-8_i32 = arith.constant -8 : i32
    %37 = vector.broadcast %c-8_i32 : i32 to vector<16x16xi32>
    %38 = arith.andi %35, %37 : vector<16x16xi32>
    %c-8_i32_10 = arith.constant -8 : i32
    %39 = vector.broadcast %c-8_i32_10 : i32 to vector<16x16xi32>
    %40 = arith.andi %36, %39 : vector<16x16xi32>
    %41 = arith.cmpi eq, %38, %40 : vector<16x16xi32>
    %c0_11 = arith.constant 0 : index
    %c0_12 = arith.constant 0 : index
    %42 = vector.load %arg1[%c0_11, %c0_12] : memref<1x16xf32, #tpu.memory_space<vmem>>, vector<1x16xf32>
    %cst_13 = arith.constant 0.000000e+00 : f32
    %43 = vector.shape_cast %42 : vector<1x16xf32> to vector<1x16xf32>
    %44 = vector.broadcast %43 : vector<1x16xf32> to vector<16x16xf32>
    %45 = vector.broadcast %cst_13 : f32 to vector<16x16xf32>
    %46 = arith.select %41, %44, %45 : vector<16x16xi1>, vector<16x16xf32>
    %cst_14 = arith.constant 1.000000e+00 : f32
    %47 = vector.broadcast %cst_14 : f32 to vector<16x16xf32>
    %48 = arith.subf %46, %47 : vector<16x16xf32>
    %cst_15 = arith.constant 1.000000e+09 : f32
    %49 = vector.broadcast %cst_15 : f32 to vector<16x16xf32>
    %50 = arith.mulf %48, %49 : vector<16x16xf32>
    %c0_16 = arith.constant 0 : index
    %c0_17 = arith.constant 0 : index
    %c0_18 = arith.constant 0 : index
    %51 = vector.load %arg2[%c0_16, %c0_17, %c0_18] : memref<2x96x128xf32, #tpu.memory_space<vmem>>, vector<1x32x96xf32>
    %52 = vector.shape_cast %51 : vector<1x32x96xf32> to vector<32x96xf32>
    %cst_19 = arith.constant dense<0.000000e+00> : vector<16x96xf32>
    %53 = tpu.matmul %34, %52, %cst_19 {dimension_numbers = #tpu.dot_dimension_numbers<[1], [0], [0], [1], [0, 0, 1, 1], [], []>} : vector<16x32xf32>, vector<32x96xf32>, vector<16x96xf32> -> vector<16x96xf32>
    %c0_20 = arith.constant 0 : index
    %c0_21 = arith.constant 0 : index
    %c0_22 = arith.constant 0 : index
    %54 = vector.load %arg3[%c0_20, %c0_21, %c0_22] : memref<2x8x128xf32, #tpu.memory_space<vmem>>, vector<1x1x96xf32>
    %55 = vector.shape_cast %54 : vector<1x1x96xf32> to vector<1x96xf32>
    %56 = vector.broadcast %55 : vector<1x96xf32> to vector<16x96xf32>
    %57 = arith.addf %53, %56 : vector<16x96xf32>
    %58 = vector.extract_strided_slice %57 {offsets = [0, 0], sizes = [16, 8], strides = [1, 1]} : vector<16x96xf32> to vector<16x8xf32>
    %59 = vector.extract_strided_slice %57 {offsets = [0, 32], sizes = [16, 8], strides = [1, 1]} : vector<16x96xf32> to vector<16x8xf32>
    %60 = vector.extract_strided_slice %57 {offsets = [0, 64], sizes = [16, 8], strides = [1, 1]} : vector<16x96xf32> to vector<16x8xf32>
    %cst_23 = arith.constant dense<0.000000e+00> : vector<16x16xf32>
    %61 = tpu.matmul %58, %59, %cst_23 {dimension_numbers = #tpu.dot_dimension_numbers<[1], [1], [0], [0], [0, 0, 1, 0], [], []>} : vector<16x8xf32>, vector<16x8xf32>, vector<16x16xf32> -> vector<16x16xf32>
    %62 = arith.addf %61, %50 : vector<16x16xf32>
    %cst_24 = arith.constant dense<0xFF800000> : vector<16xf32>
    %63 = vector.multi_reduction <maximumf>, %62, %cst_24 [1] : vector<16x16xf32> to vector<16xf32>
    %64 = vector.shape_cast %63 : vector<16xf32> to vector<16x1xf32>
    %65 = vector.broadcast %64 : vector<16x1xf32> to vector<16x16xf32>
    %66 = arith.subf %62, %65 : vector<16x16xf32>
    %67 = math.exp %66 : vector<16x16xf32>
    %cst_25 = arith.constant dense<0.000000e+00> : vector<16xf32>
    %68 = vector.multi_reduction <add>, %67, %cst_25 [1] : vector<16x16xf32> to vector<16xf32>
    %69 = vector.shape_cast %68 : vector<16xf32> to vector<16x1xf32>
    %70 = tpu.reciprocal %69 {approx = true} : vector<16x1xf32> -> vector<16x1xf32>
    %71 = vector.broadcast %70 : vector<16x1xf32> to vector<16x16xf32>
    %72 = arith.mulf %67, %71 : vector<16x16xf32>
    %cst_26 = arith.constant dense<0.000000e+00> : vector<16x8xf32>
    %73 = tpu.matmul %72, %60, %cst_26 {dimension_numbers = #tpu.dot_dimension_numbers<[1], [0], [0], [1], [0, 0, 1, 1], [], []>} : vector<16x16xf32>, vector<16x8xf32>, vector<16x8xf32> -> vector<16x8xf32>
    %74 = vector.extract_strided_slice %57 {offsets = [0, 8], sizes = [16, 8], strides = [1, 1]} : vector<16x96xf32> to vector<16x8xf32>
    %75 = vector.extract_strided_slice %57 {offsets = [0, 40], sizes = [16, 8], strides = [1, 1]} : vector<16x96xf32> to vector<16x8xf32>
    %76 = vector.extract_strided_slice %57 {offsets = [0, 72], sizes = [16, 8], strides = [1, 1]} : vector<16x96xf32> to vector<16x8xf32>
    %cst_27 = arith.constant dense<0.000000e+00> : vector<16x16xf32>
    %77 = tpu.matmul %74, %75, %cst_27 {dimension_numbers = #tpu.dot_dimension_numbers<[1], [1], [0], [0], [0, 0, 1, 0], [], []>} : vector<16x8xf32>, vector<16x8xf32>, vector<16x16xf32> -> vector<16x16xf32>
    %78 = arith.addf %77, %50 : vector<16x16xf32>
    %cst_28 = arith.constant dense<0xFF800000> : vector<16xf32>
    %79 = vector.multi_reduction <maximumf>, %78, %cst_28 [1] : vector<16x16xf32> to vector<16xf32>
    %80 = vector.shape_cast %79 : vector<16xf32> to vector<16x1xf32>
    %81 = vector.broadcast %80 : vector<16x1xf32> to vector<16x16xf32>
    %82 = arith.subf %78, %81 : vector<16x16xf32>
    %83 = math.exp %82 : vector<16x16xf32>
    %cst_29 = arith.constant dense<0.000000e+00> : vector<16xf32>
    %84 = vector.multi_reduction <add>, %83, %cst_29 [1] : vector<16x16xf32> to vector<16xf32>
    %85 = vector.shape_cast %84 : vector<16xf32> to vector<16x1xf32>
    %86 = tpu.reciprocal %85 {approx = true} : vector<16x1xf32> -> vector<16x1xf32>
    %87 = vector.broadcast %86 : vector<16x1xf32> to vector<16x16xf32>
    %88 = arith.mulf %83, %87 : vector<16x16xf32>
    %cst_30 = arith.constant dense<0.000000e+00> : vector<16x8xf32>
    %89 = tpu.matmul %88, %76, %cst_30 {dimension_numbers = #tpu.dot_dimension_numbers<[1], [0], [0], [1], [0, 0, 1, 1], [], []>} : vector<16x16xf32>, vector<16x8xf32>, vector<16x8xf32> -> vector<16x8xf32>
    %90 = vector.extract_strided_slice %57 {offsets = [0, 16], sizes = [16, 8], strides = [1, 1]} : vector<16x96xf32> to vector<16x8xf32>
    %91 = vector.extract_strided_slice %57 {offsets = [0, 48], sizes = [16, 8], strides = [1, 1]} : vector<16x96xf32> to vector<16x8xf32>
    %92 = vector.extract_strided_slice %57 {offsets = [0, 80], sizes = [16, 8], strides = [1, 1]} : vector<16x96xf32> to vector<16x8xf32>
    %cst_31 = arith.constant dense<0.000000e+00> : vector<16x16xf32>
    %93 = tpu.matmul %90, %91, %cst_31 {dimension_numbers = #tpu.dot_dimension_numbers<[1], [1], [0], [0], [0, 0, 1, 0], [], []>} : vector<16x8xf32>, vector<16x8xf32>, vector<16x16xf32> -> vector<16x16xf32>
    %94 = arith.addf %93, %50 : vector<16x16xf32>
    %cst_32 = arith.constant dense<0xFF800000> : vector<16xf32>
    %95 = vector.multi_reduction <maximumf>, %94, %cst_32 [1] : vector<16x16xf32> to vector<16xf32>
    %96 = vector.shape_cast %95 : vector<16xf32> to vector<16x1xf32>
    %97 = vector.broadcast %96 : vector<16x1xf32> to vector<16x16xf32>
    %98 = arith.subf %94, %97 : vector<16x16xf32>
    %99 = math.exp %98 : vector<16x16xf32>
    %cst_33 = arith.constant dense<0.000000e+00> : vector<16xf32>
    %100 = vector.multi_reduction <add>, %99, %cst_33 [1] : vector<16x16xf32> to vector<16xf32>
    %101 = vector.shape_cast %100 : vector<16xf32> to vector<16x1xf32>
    %102 = tpu.reciprocal %101 {approx = true} : vector<16x1xf32> -> vector<16x1xf32>
    %103 = vector.broadcast %102 : vector<16x1xf32> to vector<16x16xf32>
    %104 = arith.mulf %99, %103 : vector<16x16xf32>
    %cst_34 = arith.constant dense<0.000000e+00> : vector<16x8xf32>
    %105 = tpu.matmul %104, %92, %cst_34 {dimension_numbers = #tpu.dot_dimension_numbers<[1], [0], [0], [1], [0, 0, 1, 1], [], []>} : vector<16x16xf32>, vector<16x8xf32>, vector<16x8xf32> -> vector<16x8xf32>
    %106 = vector.extract_strided_slice %57 {offsets = [0, 24], sizes = [16, 8], strides = [1, 1]} : vector<16x96xf32> to vector<16x8xf32>
    %107 = vector.extract_strided_slice %57 {offsets = [0, 56], sizes = [16, 8], strides = [1, 1]} : vector<16x96xf32> to vector<16x8xf32>
    %108 = vector.extract_strided_slice %57 {offsets = [0, 88], sizes = [16, 8], strides = [1, 1]} : vector<16x96xf32> to vector<16x8xf32>
    %cst_35 = arith.constant dense<0.000000e+00> : vector<16x16xf32>
    %109 = tpu.matmul %106, %107, %cst_35 {dimension_numbers = #tpu.dot_dimension_numbers<[1], [1], [0], [0], [0, 0, 1, 0], [], []>} : vector<16x8xf32>, vector<16x8xf32>, vector<16x16xf32> -> vector<16x16xf32>
    %110 = arith.addf %109, %50 : vector<16x16xf32>
    %cst_36 = arith.constant dense<0xFF800000> : vector<16xf32>
    %111 = vector.multi_reduction <maximumf>, %110, %cst_36 [1] : vector<16x16xf32> to vector<16xf32>
    %112 = vector.shape_cast %111 : vector<16xf32> to vector<16x1xf32>
    %113 = vector.broadcast %112 : vector<16x1xf32> to vector<16x16xf32>
    %114 = arith.subf %110, %113 : vector<16x16xf32>
    %115 = math.exp %114 : vector<16x16xf32>
    %cst_37 = arith.constant dense<0.000000e+00> : vector<16xf32>
    %116 = vector.multi_reduction <add>, %115, %cst_37 [1] : vector<16x16xf32> to vector<16xf32>
    %117 = vector.shape_cast %116 : vector<16xf32> to vector<16x1xf32>
    %118 = tpu.reciprocal %117 {approx = true} : vector<16x1xf32> -> vector<16x1xf32>
    %119 = vector.broadcast %118 : vector<16x1xf32> to vector<16x16xf32>
    %120 = arith.mulf %115, %119 : vector<16x16xf32>
    %cst_38 = arith.constant dense<0.000000e+00> : vector<16x8xf32>
    %121 = tpu.matmul %120, %108, %cst_38 {dimension_numbers = #tpu.dot_dimension_numbers<[1], [0], [0], [1], [0, 0, 1, 1], [], []>} : vector<16x16xf32>, vector<16x8xf32>, vector<16x8xf32> -> vector<16x8xf32>
    %122 = tpu.concatenate %73, %89, %105, %121 in 1 : vector<16x8xf32>, vector<16x8xf32>, vector<16x8xf32>, vector<16x8xf32> -> vector<16x32xf32>
    %c0_39 = arith.constant 0 : index
    %c0_40 = arith.constant 0 : index
    %c96 = arith.constant 96 : index
    %123 = vector.load %arg2[%c0_39, %c0_40, %c96] : memref<2x96x128xf32, #tpu.memory_space<vmem>>, vector<1x32x32xf32>
    %124 = vector.shape_cast %123 : vector<1x32x32xf32> to vector<32x32xf32>
    %cst_41 = arith.constant dense<0.000000e+00> : vector<16x32xf32>
    %125 = tpu.matmul %122, %124, %cst_41 {dimension_numbers = #tpu.dot_dimension_numbers<[1], [0], [0], [1], [0, 0, 1, 1], [], []>} : vector<16x32xf32>, vector<32x32xf32>, vector<16x32xf32> -> vector<16x32xf32>
    %c0_42 = arith.constant 0 : index
    %c1 = arith.constant 1 : index
    %c0_43 = arith.constant 0 : index
    %126 = vector.load %arg3[%c0_42, %c1, %c0_43] : memref<2x8x128xf32, #tpu.memory_space<vmem>>, vector<1x1x32xf32>
    %127 = vector.shape_cast %126 : vector<1x1x32xf32> to vector<1x32xf32>
    %128 = vector.broadcast %127 : vector<1x32xf32> to vector<16x32xf32>
    %129 = arith.addf %125, %128 : vector<16x32xf32>
    %130 = arith.addf %129, %34 : vector<16x32xf32>
    %c0_44 = arith.constant 0 : index
    %c2 = arith.constant 2 : index
    %c0_45 = arith.constant 0 : index
    %131 = vector.load %arg3[%c0_44, %c2, %c0_45] : memref<2x8x128xf32, #tpu.memory_space<vmem>>, vector<1x1x32xf32>
    %132 = vector.shape_cast %131 : vector<1x1x32xf32> to vector<1x32xf32>
    %c0_46 = arith.constant 0 : index
    %c3 = arith.constant 3 : index
    %c0_47 = arith.constant 0 : index
    %133 = vector.load %arg3[%c0_46, %c3, %c0_47] : memref<2x8x128xf32, #tpu.memory_space<vmem>>, vector<1x1x32xf32>
    %134 = vector.shape_cast %133 : vector<1x1x32xf32> to vector<1x32xf32>
    %cst_48 = arith.constant dense<0.000000e+00> : vector<16xf32>
    %135 = vector.multi_reduction <add>, %130, %cst_48 [1] : vector<16x32xf32> to vector<16xf32>
    %136 = vector.shape_cast %135 : vector<16xf32> to vector<16x1xf32>
    %cst_49 = arith.constant 3.200000e+01 : f32
    %137 = vector.broadcast %cst_49 : f32 to vector<16x1xf32>
    %138 = arith.divf %136, %137 : vector<16x1xf32>
    %139 = vector.broadcast %138 : vector<16x1xf32> to vector<16x32xf32>
    %140 = arith.subf %130, %139 : vector<16x32xf32>
    %141 = arith.mulf %140, %140 : vector<16x32xf32>
    %cst_50 = arith.constant dense<0.000000e+00> : vector<16xf32>
    %142 = vector.multi_reduction <add>, %141, %cst_50 [1] : vector<16x32xf32> to vector<16xf32>
    %143 = vector.shape_cast %142 : vector<16xf32> to vector<16x1xf32>
    %cst_51 = arith.constant 3.200000e+01 : f32
    %144 = vector.broadcast %cst_51 : f32 to vector<16x1xf32>
    %145 = arith.divf %143, %144 : vector<16x1xf32>
    %146 = vector.broadcast %138 : vector<16x1xf32> to vector<16x32xf32>
    %147 = arith.subf %130, %146 : vector<16x32xf32>
    %cst_52 = arith.constant 9.99999996E-13 : f32
    %148 = vector.broadcast %cst_52 : f32 to vector<16x1xf32>
    %149 = arith.addf %145, %148 : vector<16x1xf32>
    %150 = math.rsqrt %149 : vector<16x1xf32>
    %151 = vector.broadcast %150 : vector<16x1xf32> to vector<16x32xf32>
    %152 = arith.mulf %147, %151 : vector<16x32xf32>
    %153 = vector.broadcast %132 : vector<1x32xf32> to vector<16x32xf32>
    %154 = arith.mulf %152, %153 : vector<16x32xf32>
    %155 = vector.broadcast %134 : vector<1x32xf32> to vector<16x32xf32>
    %156 = arith.addf %154, %155 : vector<16x32xf32>
    %c0_53 = arith.constant 0 : index
    %c32_54 = arith.constant 32 : index
    %c0_55 = arith.constant 0 : index
    %157 = vector.load %arg2[%c0_53, %c32_54, %c0_55] : memref<2x96x128xf32, #tpu.memory_space<vmem>>, vector<1x32x64xf32>
    %158 = vector.shape_cast %157 : vector<1x32x64xf32> to vector<32x64xf32>
    %cst_56 = arith.constant dense<0.000000e+00> : vector<16x64xf32>
    %159 = tpu.matmul %156, %158, %cst_56 {dimension_numbers = #tpu.dot_dimension_numbers<[1], [0], [0], [1], [0, 0, 1, 1], [], []>} : vector<16x32xf32>, vector<32x64xf32>, vector<16x64xf32> -> vector<16x64xf32>
    %c0_57 = arith.constant 0 : index
    %c4 = arith.constant 4 : index
    %c0_58 = arith.constant 0 : index
    %160 = vector.load %arg3[%c0_57, %c4, %c0_58] : memref<2x8x128xf32, #tpu.memory_space<vmem>>, vector<1x1x64xf32>
    %161 = vector.shape_cast %160 : vector<1x1x64xf32> to vector<1x64xf32>
    %162 = vector.broadcast %161 : vector<1x64xf32> to vector<16x64xf32>
    %163 = arith.addf %159, %162 : vector<16x64xf32>
    %164 = arith.mulf %163, %163 : vector<16x64xf32>
    %165 = arith.mulf %163, %164 : vector<16x64xf32>
    %cst_59 = arith.constant 4.471500e-02 : f32
    %166 = vector.broadcast %cst_59 : f32 to vector<16x64xf32>
    %167 = arith.mulf %166, %165 : vector<16x64xf32>
    %168 = arith.addf %163, %167 : vector<16x64xf32>
    %cst_60 = arith.constant 0.797884583 : f32
    %169 = vector.broadcast %cst_60 : f32 to vector<16x64xf32>
    %170 = arith.mulf %169, %168 : vector<16x64xf32>
    %171 = math.tanh %170 : vector<16x64xf32>
    %cst_61 = arith.constant 1.000000e+00 : f32
    %172 = vector.broadcast %cst_61 : f32 to vector<16x64xf32>
    %173 = arith.addf %172, %171 : vector<16x64xf32>
    %cst_62 = arith.constant 5.000000e-01 : f32
    %174 = vector.broadcast %cst_62 : f32 to vector<16x64xf32>
    %175 = arith.mulf %174, %173 : vector<16x64xf32>
    %176 = arith.mulf %163, %175 : vector<16x64xf32>
    %c0_63 = arith.constant 0 : index
    %c32_64 = arith.constant 32 : index
    %c64 = arith.constant 64 : index
    %177 = vector.load %arg2[%c0_63, %c32_64, %c64] : memref<2x96x128xf32, #tpu.memory_space<vmem>>, vector<1x64x32xf32>
    %178 = vector.shape_cast %177 : vector<1x64x32xf32> to vector<64x32xf32>
    %cst_65 = arith.constant dense<0.000000e+00> : vector<16x32xf32>
    %179 = tpu.matmul %176, %178, %cst_65 {dimension_numbers = #tpu.dot_dimension_numbers<[1], [0], [0], [1], [0, 0, 1, 1], [], []>} : vector<16x64xf32>, vector<64x32xf32>, vector<16x32xf32> -> vector<16x32xf32>
    %c0_66 = arith.constant 0 : index
    %c5 = arith.constant 5 : index
    %c0_67 = arith.constant 0 : index
    %180 = vector.load %arg3[%c0_66, %c5, %c0_67] : memref<2x8x128xf32, #tpu.memory_space<vmem>>, vector<1x1x32xf32>
    %181 = vector.shape_cast %180 : vector<1x1x32xf32> to vector<1x32xf32>
    %182 = vector.broadcast %181 : vector<1x32xf32> to vector<16x32xf32>
    %183 = arith.addf %179, %182 : vector<16x32xf32>
    %184 = arith.addf %183, %156 : vector<16x32xf32>
    %c0_68 = arith.constant 0 : index
    %c6 = arith.constant 6 : index
    %c0_69 = arith.constant 0 : index
    %185 = vector.load %arg3[%c0_68, %c6, %c0_69] : memref<2x8x128xf32, #tpu.memory_space<vmem>>, vector<1x1x32xf32>
    %186 = vector.shape_cast %185 : vector<1x1x32xf32> to vector<1x32xf32>
    %c0_70 = arith.constant 0 : index
    %c7 = arith.constant 7 : index
    %c0_71 = arith.constant 0 : index
    %187 = vector.load %arg3[%c0_70, %c7, %c0_71] : memref<2x8x128xf32, #tpu.memory_space<vmem>>, vector<1x1x32xf32>
    %188 = vector.shape_cast %187 : vector<1x1x32xf32> to vector<1x32xf32>
    %cst_72 = arith.constant dense<0.000000e+00> : vector<16xf32>
    %189 = vector.multi_reduction <add>, %184, %cst_72 [1] : vector<16x32xf32> to vector<16xf32>
    %190 = vector.shape_cast %189 : vector<16xf32> to vector<16x1xf32>
    %cst_73 = arith.constant 3.200000e+01 : f32
    %191 = vector.broadcast %cst_73 : f32 to vector<16x1xf32>
    %192 = arith.divf %190, %191 : vector<16x1xf32>
    %193 = vector.broadcast %192 : vector<16x1xf32> to vector<16x32xf32>
    %194 = arith.subf %184, %193 : vector<16x32xf32>
    %195 = arith.mulf %194, %194 : vector<16x32xf32>
    %cst_74 = arith.constant dense<0.000000e+00> : vector<16xf32>
    %196 = vector.multi_reduction <add>, %195, %cst_74 [1] : vector<16x32xf32> to vector<16xf32>
    %197 = vector.shape_cast %196 : vector<16xf32> to vector<16x1xf32>
    %cst_75 = arith.constant 3.200000e+01 : f32
    %198 = vector.broadcast %cst_75 : f32 to vector<16x1xf32>
    %199 = arith.divf %197, %198 : vector<16x1xf32>
    %200 = vector.broadcast %192 : vector<16x1xf32> to vector<16x32xf32>
    %201 = arith.subf %184, %200 : vector<16x32xf32>
    %cst_76 = arith.constant 9.99999996E-13 : f32
    %202 = vector.broadcast %cst_76 : f32 to vector<16x1xf32>
    %203 = arith.addf %199, %202 : vector<16x1xf32>
    %204 = math.rsqrt %203 : vector<16x1xf32>
    %205 = vector.broadcast %204 : vector<16x1xf32> to vector<16x32xf32>
    %206 = arith.mulf %201, %205 : vector<16x32xf32>
    %207 = vector.broadcast %186 : vector<1x32xf32> to vector<16x32xf32>
    %208 = arith.mulf %206, %207 : vector<16x32xf32>
    %209 = vector.broadcast %188 : vector<1x32xf32> to vector<16x32xf32>
    %210 = arith.addf %208, %209 : vector<16x32xf32>
    %c1_77 = arith.constant 1 : index
    %c0_78 = arith.constant 0 : index
    %c0_79 = arith.constant 0 : index
    %211 = vector.load %arg2[%c1_77, %c0_78, %c0_79] : memref<2x96x128xf32, #tpu.memory_space<vmem>>, vector<1x32x96xf32>
    %212 = vector.shape_cast %211 : vector<1x32x96xf32> to vector<32x96xf32>
    %cst_80 = arith.constant dense<0.000000e+00> : vector<16x96xf32>
    %213 = tpu.matmul %210, %212, %cst_80 {dimension_numbers = #tpu.dot_dimension_numbers<[1], [0], [0], [1], [0, 0, 1, 1], [], []>} : vector<16x32xf32>, vector<32x96xf32>, vector<16x96xf32> -> vector<16x96xf32>
    %c1_81 = arith.constant 1 : index
    %c0_82 = arith.constant 0 : index
    %c0_83 = arith.constant 0 : index
    %214 = vector.load %arg3[%c1_81, %c0_82, %c0_83] : memref<2x8x128xf32, #tpu.memory_space<vmem>>, vector<1x1x96xf32>
    %215 = vector.shape_cast %214 : vector<1x1x96xf32> to vector<1x96xf32>
    %216 = vector.broadcast %215 : vector<1x96xf32> to vector<16x96xf32>
    %217 = arith.addf %213, %216 : vector<16x96xf32>
    %218 = vector.extract_strided_slice %217 {offsets = [0, 0], sizes = [16, 8], strides = [1, 1]} : vector<16x96xf32> to vector<16x8xf32>
    %219 = vector.extract_strided_slice %217 {offsets = [0, 32], sizes = [16, 8], strides = [1, 1]} : vector<16x96xf32> to vector<16x8xf32>
    %220 = vector.extract_strided_slice %217 {offsets = [0, 64], sizes = [16, 8], strides = [1, 1]} : vector<16x96xf32> to vector<16x8xf32>
    %cst_84 = arith.constant dense<0.000000e+00> : vector<16x16xf32>
    %221 = tpu.matmul %218, %219, %cst_84 {dimension_numbers = #tpu.dot_dimension_numbers<[1], [1], [0], [0], [0, 0, 1, 0], [], []>} : vector<16x8xf32>, vector<16x8xf32>, vector<16x16xf32> -> vector<16x16xf32>
    %222 = arith.addf %221, %50 : vector<16x16xf32>
    %cst_85 = arith.constant dense<0xFF800000> : vector<16xf32>
    %223 = vector.multi_reduction <maximumf>, %222, %cst_85 [1] : vector<16x16xf32> to vector<16xf32>
    %224 = vector.shape_cast %223 : vector<16xf32> to vector<16x1xf32>
    %225 = vector.broadcast %224 : vector<16x1xf32> to vector<16x16xf32>
    %226 = arith.subf %222, %225 : vector<16x16xf32>
    %227 = math.exp %226 : vector<16x16xf32>
    %cst_86 = arith.constant dense<0.000000e+00> : vector<16xf32>
    %228 = vector.multi_reduction <add>, %227, %cst_86 [1] : vector<16x16xf32> to vector<16xf32>
    %229 = vector.shape_cast %228 : vector<16xf32> to vector<16x1xf32>
    %230 = tpu.reciprocal %229 {approx = true} : vector<16x1xf32> -> vector<16x1xf32>
    %231 = vector.broadcast %230 : vector<16x1xf32> to vector<16x16xf32>
    %232 = arith.mulf %227, %231 : vector<16x16xf32>
    %cst_87 = arith.constant dense<0.000000e+00> : vector<16x8xf32>
    %233 = tpu.matmul %232, %220, %cst_87 {dimension_numbers = #tpu.dot_dimension_numbers<[1], [0], [0], [1], [0, 0, 1, 1], [], []>} : vector<16x16xf32>, vector<16x8xf32>, vector<16x8xf32> -> vector<16x8xf32>
    %234 = vector.extract_strided_slice %217 {offsets = [0, 8], sizes = [16, 8], strides = [1, 1]} : vector<16x96xf32> to vector<16x8xf32>
    %235 = vector.extract_strided_slice %217 {offsets = [0, 40], sizes = [16, 8], strides = [1, 1]} : vector<16x96xf32> to vector<16x8xf32>
    %236 = vector.extract_strided_slice %217 {offsets = [0, 72], sizes = [16, 8], strides = [1, 1]} : vector<16x96xf32> to vector<16x8xf32>
    %cst_88 = arith.constant dense<0.000000e+00> : vector<16x16xf32>
    %237 = tpu.matmul %234, %235, %cst_88 {dimension_numbers = #tpu.dot_dimension_numbers<[1], [1], [0], [0], [0, 0, 1, 0], [], []>} : vector<16x8xf32>, vector<16x8xf32>, vector<16x16xf32> -> vector<16x16xf32>
    %238 = arith.addf %237, %50 : vector<16x16xf32>
    %cst_89 = arith.constant dense<0xFF800000> : vector<16xf32>
    %239 = vector.multi_reduction <maximumf>, %238, %cst_89 [1] : vector<16x16xf32> to vector<16xf32>
    %240 = vector.shape_cast %239 : vector<16xf32> to vector<16x1xf32>
    %241 = vector.broadcast %240 : vector<16x1xf32> to vector<16x16xf32>
    %242 = arith.subf %238, %241 : vector<16x16xf32>
    %243 = math.exp %242 : vector<16x16xf32>
    %cst_90 = arith.constant dense<0.000000e+00> : vector<16xf32>
    %244 = vector.multi_reduction <add>, %243, %cst_90 [1] : vector<16x16xf32> to vector<16xf32>
    %245 = vector.shape_cast %244 : vector<16xf32> to vector<16x1xf32>
    %246 = tpu.reciprocal %245 {approx = true} : vector<16x1xf32> -> vector<16x1xf32>
    %247 = vector.broadcast %246 : vector<16x1xf32> to vector<16x16xf32>
    %248 = arith.mulf %243, %247 : vector<16x16xf32>
    %cst_91 = arith.constant dense<0.000000e+00> : vector<16x8xf32>
    %249 = tpu.matmul %248, %236, %cst_91 {dimension_numbers = #tpu.dot_dimension_numbers<[1], [0], [0], [1], [0, 0, 1, 1], [], []>} : vector<16x16xf32>, vector<16x8xf32>, vector<16x8xf32> -> vector<16x8xf32>
    %250 = vector.extract_strided_slice %217 {offsets = [0, 16], sizes = [16, 8], strides = [1, 1]} : vector<16x96xf32> to vector<16x8xf32>
    %251 = vector.extract_strided_slice %217 {offsets = [0, 48], sizes = [16, 8], strides = [1, 1]} : vector<16x96xf32> to vector<16x8xf32>
    %252 = vector.extract_strided_slice %217 {offsets = [0, 80], sizes = [16, 8], strides = [1, 1]} : vector<16x96xf32> to vector<16x8xf32>
    %cst_92 = arith.constant dense<0.000000e+00> : vector<16x16xf32>
    %253 = tpu.matmul %250, %251, %cst_92 {dimension_numbers = #tpu.dot_dimension_numbers<[1], [1], [0], [0], [0, 0, 1, 0], [], []>} : vector<16x8xf32>, vector<16x8xf32>, vector<16x16xf32> -> vector<16x16xf32>
    %254 = arith.addf %253, %50 : vector<16x16xf32>
    %cst_93 = arith.constant dense<0xFF800000> : vector<16xf32>
    %255 = vector.multi_reduction <maximumf>, %254, %cst_93 [1] : vector<16x16xf32> to vector<16xf32>
    %256 = vector.shape_cast %255 : vector<16xf32> to vector<16x1xf32>
    %257 = vector.broadcast %256 : vector<16x1xf32> to vector<16x16xf32>
    %258 = arith.subf %254, %257 : vector<16x16xf32>
    %259 = math.exp %258 : vector<16x16xf32>
    %cst_94 = arith.constant dense<0.000000e+00> : vector<16xf32>
    %260 = vector.multi_reduction <add>, %259, %cst_94 [1] : vector<16x16xf32> to vector<16xf32>
    %261 = vector.shape_cast %260 : vector<16xf32> to vector<16x1xf32>
    %262 = tpu.reciprocal %261 {approx = true} : vector<16x1xf32> -> vector<16x1xf32>
    %263 = vector.broadcast %262 : vector<16x1xf32> to vector<16x16xf32>
    %264 = arith.mulf %259, %263 : vector<16x16xf32>
    %cst_95 = arith.constant dense<0.000000e+00> : vector<16x8xf32>
    %265 = tpu.matmul %264, %252, %cst_95 {dimension_numbers = #tpu.dot_dimension_numbers<[1], [0], [0], [1], [0, 0, 1, 1], [], []>} : vector<16x16xf32>, vector<16x8xf32>, vector<16x8xf32> -> vector<16x8xf32>
    %266 = vector.extract_strided_slice %217 {offsets = [0, 24], sizes = [16, 8], strides = [1, 1]} : vector<16x96xf32> to vector<16x8xf32>
    %267 = vector.extract_strided_slice %217 {offsets = [0, 56], sizes = [16, 8], strides = [1, 1]} : vector<16x96xf32> to vector<16x8xf32>
    %268 = vector.extract_strided_slice %217 {offsets = [0, 88], sizes = [16, 8], strides = [1, 1]} : vector<16x96xf32> to vector<16x8xf32>
    %cst_96 = arith.constant dense<0.000000e+00> : vector<16x16xf32>
    %269 = tpu.matmul %266, %267, %cst_96 {dimension_numbers = #tpu.dot_dimension_numbers<[1], [1], [0], [0], [0, 0, 1, 0], [], []>} : vector<16x8xf32>, vector<16x8xf32>, vector<16x16xf32> -> vector<16x16xf32>
    %270 = arith.addf %269, %50 : vector<16x16xf32>
    %cst_97 = arith.constant dense<0xFF800000> : vector<16xf32>
    %271 = vector.multi_reduction <maximumf>, %270, %cst_97 [1] : vector<16x16xf32> to vector<16xf32>
    %272 = vector.shape_cast %271 : vector<16xf32> to vector<16x1xf32>
    %273 = vector.broadcast %272 : vector<16x1xf32> to vector<16x16xf32>
    %274 = arith.subf %270, %273 : vector<16x16xf32>
    %275 = math.exp %274 : vector<16x16xf32>
    %cst_98 = arith.constant dense<0.000000e+00> : vector<16xf32>
    %276 = vector.multi_reduction <add>, %275, %cst_98 [1] : vector<16x16xf32> to vector<16xf32>
    %277 = vector.shape_cast %276 : vector<16xf32> to vector<16x1xf32>
    %278 = tpu.reciprocal %277 {approx = true} : vector<16x1xf32> -> vector<16x1xf32>
    %279 = vector.broadcast %278 : vector<16x1xf32> to vector<16x16xf32>
    %280 = arith.mulf %275, %279 : vector<16x16xf32>
    %cst_99 = arith.constant dense<0.000000e+00> : vector<16x8xf32>
    %281 = tpu.matmul %280, %268, %cst_99 {dimension_numbers = #tpu.dot_dimension_numbers<[1], [0], [0], [1], [0, 0, 1, 1], [], []>} : vector<16x16xf32>, vector<16x8xf32>, vector<16x8xf32> -> vector<16x8xf32>
    %282 = tpu.concatenate %233, %249, %265, %281 in 1 : vector<16x8xf32>, vector<16x8xf32>, vector<16x8xf32>, vector<16x8xf32> -> vector<16x32xf32>
    %c1_100 = arith.constant 1 : index
    %c0_101 = arith.constant 0 : index
    %c96_102 = arith.constant 96 : index
    %283 = vector.load %arg2[%c1_100, %c0_101, %c96_102] : memref<2x96x128xf32, #tpu.memory_space<vmem>>, vector<1x32x32xf32>
    %284 = vector.shape_cast %283 : vector<1x32x32xf32> to vector<32x32xf32>
    %cst_103 = arith.constant dense<0.000000e+00> : vector<16x32xf32>
    %285 = tpu.matmul %282, %284, %cst_103 {dimension_numbers = #tpu.dot_dimension_numbers<[1], [0], [0], [1], [0, 0, 1, 1], [], []>} : vector<16x32xf32>, vector<32x32xf32>, vector<16x32xf32> -> vector<16x32xf32>
    %c1_104 = arith.constant 1 : index
    %c1_105 = arith.constant 1 : index
    %c0_106 = arith.constant 0 : index
    %286 = vector.load %arg3[%c1_104, %c1_105, %c0_106] : memref<2x8x128xf32, #tpu.memory_space<vmem>>, vector<1x1x32xf32>
    %287 = vector.shape_cast %286 : vector<1x1x32xf32> to vector<1x32xf32>
    %288 = vector.broadcast %287 : vector<1x32xf32> to vector<16x32xf32>
    %289 = arith.addf %285, %288 : vector<16x32xf32>
    %290 = arith.addf %289, %210 : vector<16x32xf32>
    %c1_107 = arith.constant 1 : index
    %c2_108 = arith.constant 2 : index
    %c0_109 = arith.constant 0 : index
    %291 = vector.load %arg3[%c1_107, %c2_108, %c0_109] : memref<2x8x128xf32, #tpu.memory_space<vmem>>, vector<1x1x32xf32>
    %292 = vector.shape_cast %291 : vector<1x1x32xf32> to vector<1x32xf32>
    %c1_110 = arith.constant 1 : index
    %c3_111 = arith.constant 3 : index
    %c0_112 = arith.constant 0 : index
    %293 = vector.load %arg3[%c1_110, %c3_111, %c0_112] : memref<2x8x128xf32, #tpu.memory_space<vmem>>, vector<1x1x32xf32>
    %294 = vector.shape_cast %293 : vector<1x1x32xf32> to vector<1x32xf32>
    %cst_113 = arith.constant dense<0.000000e+00> : vector<16xf32>
    %295 = vector.multi_reduction <add>, %290, %cst_113 [1] : vector<16x32xf32> to vector<16xf32>
    %296 = vector.shape_cast %295 : vector<16xf32> to vector<16x1xf32>
    %cst_114 = arith.constant 3.200000e+01 : f32
    %297 = vector.broadcast %cst_114 : f32 to vector<16x1xf32>
    %298 = arith.divf %296, %297 : vector<16x1xf32>
    %299 = vector.broadcast %298 : vector<16x1xf32> to vector<16x32xf32>
    %300 = arith.subf %290, %299 : vector<16x32xf32>
    %301 = arith.mulf %300, %300 : vector<16x32xf32>
    %cst_115 = arith.constant dense<0.000000e+00> : vector<16xf32>
    %302 = vector.multi_reduction <add>, %301, %cst_115 [1] : vector<16x32xf32> to vector<16xf32>
    %303 = vector.shape_cast %302 : vector<16xf32> to vector<16x1xf32>
    %cst_116 = arith.constant 3.200000e+01 : f32
    %304 = vector.broadcast %cst_116 : f32 to vector<16x1xf32>
    %305 = arith.divf %303, %304 : vector<16x1xf32>
    %306 = vector.broadcast %298 : vector<16x1xf32> to vector<16x32xf32>
    %307 = arith.subf %290, %306 : vector<16x32xf32>
    %cst_117 = arith.constant 9.99999996E-13 : f32
    %308 = vector.broadcast %cst_117 : f32 to vector<16x1xf32>
    %309 = arith.addf %305, %308 : vector<16x1xf32>
    %310 = math.rsqrt %309 : vector<16x1xf32>
    %311 = vector.broadcast %310 : vector<16x1xf32> to vector<16x32xf32>
    %312 = arith.mulf %307, %311 : vector<16x32xf32>
    %313 = vector.broadcast %292 : vector<1x32xf32> to vector<16x32xf32>
    %314 = arith.mulf %312, %313 : vector<16x32xf32>
    %315 = vector.broadcast %294 : vector<1x32xf32> to vector<16x32xf32>
    %316 = arith.addf %314, %315 : vector<16x32xf32>
    %c1_118 = arith.constant 1 : index
    %c32_119 = arith.constant 32 : index
    %c0_120 = arith.constant 0 : index
    %317 = vector.load %arg2[%c1_118, %c32_119, %c0_120] : memref<2x96x128xf32, #tpu.memory_space<vmem>>, vector<1x32x64xf32>
    %318 = vector.shape_cast %317 : vector<1x32x64xf32> to vector<32x64xf32>
    %cst_121 = arith.constant dense<0.000000e+00> : vector<16x64xf32>
    %319 = tpu.matmul %316, %318, %cst_121 {dimension_numbers = #tpu.dot_dimension_numbers<[1], [0], [0], [1], [0, 0, 1, 1], [], []>} : vector<16x32xf32>, vector<32x64xf32>, vector<16x64xf32> -> vector<16x64xf32>
    %c1_122 = arith.constant 1 : index
    %c4_123 = arith.constant 4 : index
    %c0_124 = arith.constant 0 : index
    %320 = vector.load %arg3[%c1_122, %c4_123, %c0_124] : memref<2x8x128xf32, #tpu.memory_space<vmem>>, vector<1x1x64xf32>
    %321 = vector.shape_cast %320 : vector<1x1x64xf32> to vector<1x64xf32>
    %322 = vector.broadcast %321 : vector<1x64xf32> to vector<16x64xf32>
    %323 = arith.addf %319, %322 : vector<16x64xf32>
    %324 = arith.mulf %323, %323 : vector<16x64xf32>
    %325 = arith.mulf %323, %324 : vector<16x64xf32>
    %cst_125 = arith.constant 4.471500e-02 : f32
    %326 = vector.broadcast %cst_125 : f32 to vector<16x64xf32>
    %327 = arith.mulf %326, %325 : vector<16x64xf32>
    %328 = arith.addf %323, %327 : vector<16x64xf32>
    %cst_126 = arith.constant 0.797884583 : f32
    %329 = vector.broadcast %cst_126 : f32 to vector<16x64xf32>
    %330 = arith.mulf %329, %328 : vector<16x64xf32>
    %331 = math.tanh %330 : vector<16x64xf32>
    %cst_127 = arith.constant 1.000000e+00 : f32
    %332 = vector.broadcast %cst_127 : f32 to vector<16x64xf32>
    %333 = arith.addf %332, %331 : vector<16x64xf32>
    %cst_128 = arith.constant 5.000000e-01 : f32
    %334 = vector.broadcast %cst_128 : f32 to vector<16x64xf32>
    %335 = arith.mulf %334, %333 : vector<16x64xf32>
    %336 = arith.mulf %323, %335 : vector<16x64xf32>
    %c1_129 = arith.constant 1 : index
    %c32_130 = arith.constant 32 : index
    %c64_131 = arith.constant 64 : index
    %337 = vector.load %arg2[%c1_129, %c32_130, %c64_131] : memref<2x96x128xf32, #tpu.memory_space<vmem>>, vector<1x64x32xf32>
    %338 = vector.shape_cast %337 : vector<1x64x32xf32> to vector<64x32xf32>
    %cst_132 = arith.constant dense<0.000000e+00> : vector<16x32xf32>
    %339 = tpu.matmul %336, %338, %cst_132 {dimension_numbers = #tpu.dot_dimension_numbers<[1], [0], [0], [1], [0, 0, 1, 1], [], []>} : vector<16x64xf32>, vector<64x32xf32>, vector<16x32xf32> -> vector<16x32xf32>
    %c1_133 = arith.constant 1 : index
    %c5_134 = arith.constant 5 : index
    %c0_135 = arith.constant 0 : index
    %340 = vector.load %arg3[%c1_133, %c5_134, %c0_135] : memref<2x8x128xf32, #tpu.memory_space<vmem>>, vector<1x1x32xf32>
    %341 = vector.shape_cast %340 : vector<1x1x32xf32> to vector<1x32xf32>
    %342 = vector.broadcast %341 : vector<1x32xf32> to vector<16x32xf32>
    %343 = arith.addf %339, %342 : vector<16x32xf32>
    %344 = arith.addf %343, %316 : vector<16x32xf32>
    %c1_136 = arith.constant 1 : index
    %c6_137 = arith.constant 6 : index
    %c0_138 = arith.constant 0 : index
    %345 = vector.load %arg3[%c1_136, %c6_137, %c0_138] : memref<2x8x128xf32, #tpu.memory_space<vmem>>, vector<1x1x32xf32>
    %346 = vector.shape_cast %345 : vector<1x1x32xf32> to vector<1x32xf32>
    %c1_139 = arith.constant 1 : index
    %c7_140 = arith.constant 7 : index
    %c0_141 = arith.constant 0 : index
    %347 = vector.load %arg3[%c1_139, %c7_140, %c0_141] : memref<2x8x128xf32, #tpu.memory_space<vmem>>, vector<1x1x32xf32>
    %348 = vector.shape_cast %347 : vector<1x1x32xf32> to vector<1x32xf32>
    %cst_142 = arith.constant dense<0.000000e+00> : vector<16xf32>
    %349 = vector.multi_reduction <add>, %344, %cst_142 [1] : vector<16x32xf32> to vector<16xf32>
    %350 = vector.shape_cast %349 : vector<16xf32> to vector<16x1xf32>
    %cst_143 = arith.constant 3.200000e+01 : f32
    %351 = vector.broadcast %cst_143 : f32 to vector<16x1xf32>
    %352 = arith.divf %350, %351 : vector<16x1xf32>
    %353 = vector.broadcast %352 : vector<16x1xf32> to vector<16x32xf32>
    %354 = arith.subf %344, %353 : vector<16x32xf32>
    %355 = arith.mulf %354, %354 : vector<16x32xf32>
    %cst_144 = arith.constant dense<0.000000e+00> : vector<16xf32>
    %356 = vector.multi_reduction <add>, %355, %cst_144 [1] : vector<16x32xf32> to vector<16xf32>
    %357 = vector.shape_cast %356 : vector<16xf32> to vector<16x1xf32>
    %cst_145 = arith.constant 3.200000e+01 : f32
    %358 = vector.broadcast %cst_145 : f32 to vector<16x1xf32>
    %359 = arith.divf %357, %358 : vector<16x1xf32>
    %360 = vector.broadcast %352 : vector<16x1xf32> to vector<16x32xf32>
    %361 = arith.subf %344, %360 : vector<16x32xf32>
    %cst_146 = arith.constant 9.99999996E-13 : f32
    %362 = vector.broadcast %cst_146 : f32 to vector<16x1xf32>
    %363 = arith.addf %359, %362 : vector<16x1xf32>
    %364 = math.rsqrt %363 : vector<16x1xf32>
    %365 = vector.broadcast %364 : vector<16x1xf32> to vector<16x32xf32>
    %366 = arith.mulf %361, %365 : vector<16x32xf32>
    %367 = vector.broadcast %346 : vector<1x32xf32> to vector<16x32xf32>
    %368 = arith.mulf %366, %367 : vector<16x32xf32>
    %369 = vector.broadcast %348 : vector<1x32xf32> to vector<16x32xf32>
    %370 = arith.addf %368, %369 : vector<16x32xf32>
    %371 = vector.shape_cast %370 : vector<16x32xf32> to vector<2x8x32xf32>
    %372 = vector.extract_strided_slice %371 {offsets = [0, 0, 0], sizes = [2, 1, 32], strides = [1, 1, 1]} : vector<2x8x32xf32> to vector<2x1x32xf32>
    %373 = vector.shape_cast %372 : vector<2x1x32xf32> to vector<2x32xf32>
    %c0_147 = arith.constant 0 : index
    %c32_148 = arith.constant 32 : index
    %374 = vector.load %arg4[%c0_147, %c32_148] : memref<184x128xf32, #tpu.memory_space<vmem>>, vector<32x32xf32>
    %cst_149 = arith.constant dense<0.000000e+00> : vector<2x32xf32>
    %375 = tpu.matmul %373, %374, %cst_149 {dimension_numbers = #tpu.dot_dimension_numbers<[1], [0], [0], [1], [0, 0, 1, 1], [], []>} : vector<2x32xf32>, vector<32x32xf32>, vector<2x32xf32> -> vector<2x32xf32>
    %c32_150 = arith.constant 32 : index
    %c32_151 = arith.constant 32 : index
    %376 = vector.load %arg4[%c32_150, %c32_151] : memref<184x128xf32, #tpu.memory_space<vmem>>, vector<1x32xf32>
    %377 = vector.broadcast %376 : vector<1x32xf32> to vector<2x32xf32>
    %378 = arith.addf %375, %377 : vector<2x32xf32>
    %cst_152 = arith.constant 0.000000e+00 : f32
    %379 = vector.broadcast %cst_152 : f32 to vector<2x32xf32>
    %380 = arith.maximumf %378, %379 : vector<2x32xf32>
    %c144 = arith.constant 144 : index
    %c0_153 = arith.constant 0 : index
    %381 = vector.load %arg4[%c144, %c0_153] : memref<184x128xf32, #tpu.memory_space<vmem>>, vector<32x128xf32>
    %cst_154 = arith.constant dense<0.000000e+00> : vector<2x128xf32>
    %382 = tpu.matmul %380, %381, %cst_154 {dimension_numbers = #tpu.dot_dimension_numbers<[1], [0], [0], [1], [0, 0, 1, 1], [], []>} : vector<2x32xf32>, vector<32x128xf32>, vector<2x128xf32> -> vector<2x128xf32>
    %c176 = arith.constant 176 : index
    %c0_155 = arith.constant 0 : index
    %383 = vector.load %arg4[%c176, %c0_155] : memref<184x128xf32, #tpu.memory_space<vmem>>, vector<1x128xf32>
    %384 = vector.broadcast %383 : vector<1x128xf32> to vector<2x128xf32>
    %385 = arith.addf %382, %384 : vector<2x128xf32>
    %c0_156 = arith.constant 0 : index
    %c0_157 = arith.constant 0 : index
    %386 = vector.load %arg5[%c0_156, %c0_157] : memref<2x128xf32, #tpu.memory_space<vmem>>, vector<2x128xf32>
    tpu.vector_store %arg5[%c0_156, %c0_157], %385 {strides = array<i32>} : memref<2x128xf32, #tpu.memory_space<vmem>>, vector<2x128xf32>,
    return
  }
}

</mosaic_0001>

<llo_original>
// kernel: distilled_model_forward.1
$region0: #{distilled_model_forward.1}
  #allocation0 [shape = 'u32[]', space=smem, size = 0x4, offset = 0x4, fixed_abs, tag = 'smem constant byte address 0x4 - core index']
  #allocation1 [shape = 'u32[72,128]{1,0:T(1,128)}', space=vmem, size = 0x9000, scoped, tag = 'internal scratch']
  %s0 = inlined_call_operand.vmem [shape: s32[16,1], index: 0, kind: input, shape index: {}]
  %s1 = inlined_call_operand.vmem [shape: f32[1,16], index: 1, kind: input, shape index: {}]
  %s2 = inlined_call_operand.hbm [shape: f32[2,96,128], index: 2, kind: input, shape index: {}]
  %s3 = inlined_call_operand.vmem [shape: f32[2,8,128], index: 3, kind: input, shape index: {}]
  %s4 = inlined_call_operand.hbm [shape: f32[184,128], index: 4, kind: input, shape index: {}]
  %s5 = inlined_call_operand.hbm [shape: f32[2,128], index: 5, kind: output, shape index: {}]
  %s6 = sld [smem:[#allocation0]]
  $region38: #{distilled_model_forward.1} parent=0
    _
  %s8 = ssub.s32 1, %s6
  %s9 = scalar_select 0, %s8, %s6
  $region1: #{distilled_model_forward.1} parent=0
    #allocation2 [shape = 'u8[98304]{0}', space=vmem, size = 0x18000, scoped, tag = 'input window, operand 2, single buffered']
    #allocation3 [shape = 's32[1]{0}', space=sflag, size = 0x4, scoped, tag = 'scoped memory for distilled_model_forward.1']
    #allocation4 [shape = 's32[1]{0}', space=sflag, size = 0x4, scoped, tag = 'scoped memory for distilled_model_forward.1']
    #allocation5 [shape = 'u8[94208]{0}', space=vmem, size = 0x17000, scoped, tag = 'input window, operand 4, single buffered']
    #allocation6 [shape = 's32[1]{0}', space=sflag, size = 0x4, scoped, tag = 'scoped memory for distilled_model_forward.1']
    #allocation7 [shape = 'u8[1024]{0}', space=vmem, size = 0x400, scoped, tag = 'output window, operand 0, single buffered']
    %10 = vsyncpa [#allocation3], 0
    %11 = vsyncpa [#allocation6], 0
    %12 = vsyncpa [#allocation4], 0
    // Predicated region
    $region2: #{distilled_model_forward.1} parent=1 // pred_check
      _
    $region3: #{distilled_model_forward.1} parent=1 // pred_check_branch
      %14 = sbr.rel (0) target = $region5
    $region4: #{distilled_model_forward.1} parent=1 // pred_region
      _
    $region5: #{distilled_model_forward.1} parent=1 // pred_fallthru
      _
    // Predicated region
    $region6: #{distilled_model_forward.1} parent=1 // pred_check
      _
    $region7: #{distilled_model_forward.1} parent=1 // pred_check_branch
      %16 = sbr.rel (0) target = $region9
    $region8: #{distilled_model_forward.1} parent=1 // pred_region
      _
    $region9: #{distilled_model_forward.1} parent=1 // pred_fallthru
      _
    // Predicated region
    $region10: #{distilled_model_forward.1} parent=1 // pred_check
      _
    $region11: #{distilled_model_forward.1} parent=1 // pred_check_branch
      %18 = sbr.rel (0) target = $region13
    $region12: #{distilled_model_forward.1} parent=1 // pred_region
      %20 = vsyncadd [#allocation3], 0
      %s21 = sshll.u32 %s2, 4
      %s22 = int_to_ptr.hbm [resolvable:$true] %s21
      %s23 = sshll.u32 [#allocation2], 4
      %s24 = int_to_ptr.vmem [resolvable:$true] %s23
      %29 = dma.hbm_to_vmem [thread:$0]  %s22, 3072, %s24, [#allocation3], 128, 128, 8
    $region13: #{distilled_model_forward.1} parent=1 // pred_fallthru
      _
    // Predicated region
    $region14: #{distilled_model_forward.1} parent=1 // pred_check
      _
    $region15: #{distilled_model_forward.1} parent=1 // pred_check_branch
      %31 = sbr.rel (0) target = $region17
    $region16: #{distilled_model_forward.1} parent=1 // pred_region
      _
    $region17: #{distilled_model_forward.1} parent=1 // pred_fallthru
      _
    // Predicated region
    $region18: #{distilled_model_forward.1} parent=1 // pred_check
      _
    $region19: #{distilled_model_forward.1} parent=1 // pred_check_branch
      %33 = sbr.rel (0) target = $region21
    $region20: #{distilled_model_forward.1} parent=1 // pred_region
      %35 = vsyncadd [#allocation6], 0
      %s36 = sshll.u32 %s4, 4
      %s37 = int_to_ptr.hbm [resolvable:$true] %s36
      %s38 = sshll.u32 [#allocation5], 4
      %s39 = int_to_ptr.vmem [resolvable:$true] %s38
      %44 = dma.hbm_to_vmem [thread:$0]  %s37, 2944, %s39, [#allocation6], 128, 128, 8
    $region21: #{distilled_model_forward.1} parent=1 // pred_fallthru
      _
    // Predicated region
    $region22: #{distilled_model_forward.1} parent=1 // pred_check
      _
    $region23: #{distilled_model_forward.1} parent=1 // pred_check_branch
      %46 = sbr.rel (0) target = $region25
    $region24: #{distilled_model_forward.1} parent=1 // pred_region
      %48 = dma.done [#allocation3], 3072
    $region25: #{distilled_model_forward.1} parent=1 // pred_fallthru
      _
    // Predicated region
    $region26: #{distilled_model_forward.1} parent=1 // pred_check
      _
    $region27: #{distilled_model_forward.1} parent=1 // pred_check_branch
      %50 = sbr.rel (0) target = $region29
    $region28: #{distilled_model_forward.1} parent=1 // pred_region
      %52 = dma.done [#allocation6], 2944
    $region29: #{distilled_model_forward.1} parent=1 // pred_fallthru
      _
    %v53 = vld [vmem:[%s0] sm:$0xff]
    %v54 = vld [vmem:[%s0 + $0x8] sm:$0xff]
    %v55 = vlaneseq
    %v56 = vand.u32 %v55, 127
    %57 = vset.pattern.permute.xlu0 0
    %58 = vperm.xlu0 %57, %v53
    %v59 = vpop.permute.xlu0 %58
    %60 = vset.pattern.permute.xlu0 0
    %61 = vperm.xlu0 %60, %v54
    %v62 = vpop.permute.xlu0 %61
    %vm63 = vcmp.eq.s32.totalorder %v56, %v59
    %vm64 = vcmp.eq.s32.totalorder %v56, %v62
    %v65 = vsel %vm63, 1, 0
    %v66 = vsel %vm64, 1, 0
    %v67 = vcvt.s32.f32 %v65
    %v68 = vcvt.s32.f32 %v66
    %v69 = vld [vmem:[#allocation5] sm:$0xff]
    %v70 = vld [vmem:[#allocation5 + $0x8] sm:$0xff]
    %v71 = vld [vmem:[#allocation5 + $0x10] sm:$0xff]
    %v72 = vld [vmem:[#allocation5 + $0x18] sm:$0xff]
    %v73 = vld [vmem:[#allocation5 + $0x20] sm:$0xff]
    %v74 = vld [vmem:[#allocation5 + $0x28] sm:$0xff]
    %v75 = vld [vmem:[#allocation5 + $0x30] sm:$0xff]
    %v76 = vld [vmem:[#allocation5 + $0x38] sm:$0xff]
    %v77 = vld [vmem:[#allocation5 + $0x40] sm:$0xff]
    %v78 = vld [vmem:[#allocation5 + $0x48] sm:$0xff]
    %v79 = vld [vmem:[#allocation5 + $0x50] sm:$0xff]
    %v80 = vld [vmem:[#allocation5 + $0x58] sm:$0xff]
    %v81 = vld [vmem:[#allocation5 + $0x60] sm:$0xff]
    %v82 = vld [vmem:[#allocation5 + $0x68] sm:$0xff]
    %v83 = vld [vmem:[#allocation5 + $0x70] sm:$0xff]
    %v84 = vld [vmem:[#allocation5 + $0x78] sm:$0xff]
    %v85 = vld [vmem:[#allocation5 + $0x80] sm:$0xff]
    %86 = vmatpush.msra.mxu0 %v84
    %87 = vmatpush.msra.mxu0 %v83
    %88 = vmatpush.msra.mxu0 %v82
    %89 = vmatpush.msra.mxu0 %v81
    %90 = vmatpush.msra.mxu0 %v80
    %91 = vmatpush.msra.mxu0 %v79
    %92 = vmatpush.msra.mxu0 %v78
    %93 = vmatpush.msra.mxu0 %v77
    %94 = vmatpush.msra.mxu0 %v76
    %95 = vmatpush.msra.mxu0 %v75
    %96 = vmatpush.msra.mxu0 %v74
    %97 = vmatpush.msra.mxu0 %v73
    %98 = vmatpush.msra.mxu0 %v72
    %99 = vmatpush.msra.mxu0 %v71
    %100 = vmatpush.msra.mxu0 %v70
    %101 = vmatpush.msra.mxu0 %v69
    %102 = vmatmul.f32.gmra.mxu0 %v67
    %v103 = vpop.f32.mrf.mxu0
    %v104 = vadd.f32 %v85, %v103
    %105 = vmatmul.f32.gmra.mxu0 %v68
    %v106 = vpop.f32.mrf.mxu0
    %v107 = vadd.f32 %v85, %v106
    %108 = vdwg.mxu0
    %v109 = vld [vmem:[#allocation5 + $0x21] sm:$0x1]
    %v110 = vld [vmem:[#allocation5 + $0x22] sm:$0x1]
    %vm111 = vcmask 261120
    %v112 = vsel %vm111, %v104, 0.0
    %113 = vadd.xlane.f32.xlu0 %v112
    %v114 = vpop.xlane.xlu0 %113
    %v115 = vsel %vm111, %v107, 0.0
    %116 = vadd.xlane.f32.xlu0 %v115
    %v117 = vpop.xlane.xlu0 %116
    %v118 = vrcp.pop 32.0
    %v119 = vmul.f32 32.0, %v118
    %v120 = vsub.f32 1.0, %v119
    %v121 = vmul.f32 %v118, %v120
    %v122 = vadd.f32 %v118, %v121
    %vm123 = vweird.f32 %v118
    %v124 = vsel %vm123, %v118, %v122
    %v125 = vmul.f32 %v114, %v124
    %v126 = vmul.f32 %v117, %v124
    %v127 = vsub.f32 %v104, %v125
    %v128 = vsub.f32 %v107, %v126
    %v129 = vmul.f32 %v127, %v127
    %v130 = vmul.f32 %v128, %v128
    %v131 = vsel %vm111, %v129, 0.0
    %132 = vadd.xlane.f32.xlu0 %v131
    %v133 = vpop.xlane.xlu0 %132
    %v134 = vsel %vm111, %v130, 0.0
    %135 = vadd.xlane.f32.xlu0 %v134
    %v136 = vpop.xlane.xlu0 %135
    %v137 = vmul.f32 %v133, %v124
    %v138 = vmul.f32 %v136, %v124
    %v139 = vadd.f32 %v137, 1e-12
    %v140 = vadd.f32 %v138, 1e-12
    %v141 = vrsqrt.pop %v139
    %v142 = vmul.f32 %v141, %v139
    %v143 = vmul.f32 %v142, %v141
    %v144 = vmul.f32 0.5, %v143
    %v145 = vsub.f32 1.5, %v144
    %v146 = vmul.f32 %v141, %v145
    %vm147 = vweird.f32 %v139
    %vm148 = vweird.f32 %v141
    %vm149 = vmor %vm147, %vm148
    %v150 = vsel %vm149, %v141, %v146
    %v151 = vrsqrt.pop %v140
    %v152 = vmul.f32 %v151, %v140
    %v153 = vmul.f32 %v152, %v151
    %v154 = vmul.f32 0.5, %v153
    %v155 = vsub.f32 1.5, %v154
    %v156 = vmul.f32 %v151, %v155
    %vm157 = vweird.f32 %v140
    %vm158 = vweird.f32 %v151
    %vm159 = vmor %vm157, %vm158
    %v160 = vsel %vm159, %v151, %v156
    %v161 = vmul.f32 %v127, %v150
    %v162 = vmul.f32 %v128, %v160
    %v163 = vperm.slane %v109, 0
    %165 = vrot.lane.b32.xlu0 %v163, 96
    %v166 = vpop.permute.xlu0 %165
    %v168 = vmul.f32 %v161, %v166
    %v169 = vmul.f32 %v162, %v166
    %v170 = vperm.slane %v110, 0
    %172 = vrot.lane.b32.xlu0 %v170, 96
    %v173 = vpop.permute.xlu0 %172
    %v175 = vadd.f32 %v168, %v173
    %v176 = vadd.f32 %v169, %v173
    %v177 = vlaneseq
    %v178 = vshrl.u32 %v177, 7
    %v179 = vadd.s32 %v178, 8
    %v180 = vand.u32 %v178, 4294967288
    %v181 = vand.u32 %v179, 4294967288
    %v182 = vand.u32 %v56, 4294967288
    %vm183 = vcmp.eq.s32.totalorder %v180, %v182
    %vm184 = vcmp.eq.s32.totalorder %v181, %v182
    %v185 = vld [vmem:[%s1] sm:$0x1]
    %v187 = vperm.slane %v185, 0
    %v189 = vsel %vm183, %v187, 0.0
    %v190 = vsel %vm184, %v187, 0.0
    %v191 = vsub.f32 %v189, 1.0
    %v192 = vsub.f32 %v190, 1.0
    %v193 = vmul.f32 %v191, 1e+09
    %v194 = vmul.f32 %v192, 1e+09
    %v195 = vld [vmem:[#allocation2] sm:$0xff]
    %v196 = vld [vmem:[#allocation2 + $0x8] sm:$0xff]
    %v197 = vld [vmem:[#allocation2 + $0x10] sm:$0xff]
    %v198 = vld [vmem:[#allocation2 + $0x18] sm:$0xff]
    %v199 = vld [vmem:[%s3] sm:$0x1]
    %v200 = vperm.slane %v199, 0
    %v202 = vsel %vm111, %v175, 0
    %v205 = vsel %vm111, %v176, 0
    %207 = vmatpush.msra.mxu0 0.0
    %208 = vmatpush.msra.mxu0 0.0
    %209 = vmatpush.msra.mxu0 0.0
    %210 = vmatpush.msra.mxu0 0.0
    %211 = vmatpush.msra.mxu0 0.0
    %212 = vmatpush.msra.mxu0 0.0
    %213 = vmatpush.msra.mxu0 0.0
    %214 = vmatpush.msra.mxu0 0.0
    %215 = vmatpush.msra.mxu0 0.0
    %216 = vmatpush.msra.mxu0 0.0
    %217 = vmatpush.msra.mxu0 0.0
    %218 = vmatpush.msra.mxu0 0.0
    %219 = vmatpush.msra.mxu0 %v198
    %220 = vmatpush.msra.mxu0 %v197
    %221 = vmatpush.msra.mxu0 %v196
    %222 = vmatpush.msra.mxu0 %v195
    %223 = vmatmul.f32.gmra.mxu0 %v202
    %v224 = vpop.f32.mrf.mxu0
    %v225 = vadd.f32 %v200, %v224
    %226 = vmatmul.f32.gmra.mxu0 %v205
    %v227 = vpop.f32.mrf.mxu0
    %v228 = vadd.f32 %v200, %v227
    %229 = vdwg.mxu0
    %232 = vrot.lane.b32.xlu0 %v225, 96
    %v233 = vpop.permute.xlu0 %232
    %234 = vrot.lane.b32.xlu0 %v228, 96
    %v235 = vpop.permute.xlu0 %234
    %vm236 = vcmask 64512
    %v237 = vsel %vm236, %v225, 0
    %v239 = vsel %vm236, %v228, 0
    %v241 = vsel %vm236, %v233, 0
    %v243 = vsel %vm236, %v235, 0
    %245 = vmatpush.xpose.msra.mxu0 0.0
    %246 = vmatpush.xpose.msra.mxu0 0.0
    %247 = vmatpush.xpose.msra.mxu0 0.0
    %248 = vmatpush.xpose.msra.mxu0 0.0
    %249 = vmatpush.xpose.msra.mxu0 0.0
    %250 = vmatpush.xpose.msra.mxu0 0.0
    %251 = vmatpush.xpose.msra.mxu0 0.0
    %252 = vmatpush.xpose.msra.mxu0 0.0
    %253 = vmatpush.xpose.msra.mxu0 0.0
    %254 = vmatpush.xpose.msra.mxu0 0.0
    %255 = vmatpush.xpose.msra.mxu0 0.0
    %256 = vmatpush.xpose.msra.mxu0 0.0
    %257 = vmatpush.xpose.msra.mxu0 0.0
    %258 = vmatpush.xpose.msra.mxu0 0.0
    %259 = vmatpush.xpose.msra.mxu0 %v243
    %260 = vmatpush.xpose.msra.mxu0 %v241
    %261 = vmatmul.f32.gmra.mxu0 %v237
    %v262 = vpop.f32.mrf.mxu0
    %v263 = vadd.f32 %v193, %v262
    %264 = vmatmul.f32.gmra.mxu0 %v239
    %v265 = vpop.f32.mrf.mxu0
    %v266 = vadd.f32 %v194, %v265
    %267 = vdwg.mxu0
    %vm268 = vcmask 130048
    %v269 = vsel %vm268, %v263, -inf
    %270 = vmax.xlane.f32.xlu0 %v269
    %v271 = vpop.xlane.xlu0 %270
    %v272 = vsel %vm268, %v266, -inf
    %273 = vmax.xlane.f32.xlu0 %v272
    %v274 = vpop.xlane.xlu0 %273
    %v275 = vsub.f32 %v263, %v271
    %v276 = vsub.f32 %v266, %v274
    %v277 = vmul.f32 %v275, 1.442695
    %v278 = vpow.pop %v277
    %v279 = vmul.f32 %v276, 1.442695
    %v280 = vpow.pop %v279
    %v281 = vsel %vm268, %v278, 0.0
    %282 = vadd.xlane.f32.xlu0 %v281
    %v283 = vpop.xlane.xlu0 %282
    %v284 = vsel %vm268, %v280, 0.0
    %285 = vadd.xlane.f32.xlu0 %v284
    %v286 = vpop.xlane.xlu0 %285
    %v287 = vrcp.pop %v283
    %v288 = vrcp.pop %v286
    %v289 = vmul.f32 %v278, %v287
    %v290 = vmul.f32 %v280, %v288
    %291 = vrot.lane.b32.xlu0 %v225, 64
    %v292 = vpop.permute.xlu0 %291
    %293 = vrot.lane.b32.xlu0 %v228, 64
    %v294 = vpop.permute.xlu0 %293
    %v298 = vsel %vm268, %v289, 0
    %v301 = vsel %vm268, %v290, 0
    %303 = vmatpush.msra.mxu0 0.0
    %304 = vmatpush.msra.mxu0 0.0
    %305 = vmatpush.msra.mxu0 0.0
    %306 = vmatpush.msra.mxu0 0.0
    %307 = vmatpush.msra.mxu0 0.0
    %308 = vmatpush.msra.mxu0 0.0
    %309 = vmatpush.msra.mxu0 0.0
    %310 = vmatpush.msra.mxu0 0.0
    %311 = vmatpush.msra.mxu0 0.0
    %312 = vmatpush.msra.mxu0 0.0
    %313 = vmatpush.msra.mxu0 0.0
    %314 = vmatpush.msra.mxu0 0.0
    %315 = vmatpush.msra.mxu0 0.0
    %316 = vmatpush.msra.mxu0 0.0
    %317 = vmatpush.msra.mxu0 %v294
    %318 = vmatpush.msra.mxu0 %v292
    %319 = vmatmul.f32.gmra.mxu0 %v298
    %v320 = vpop.f32.mrf.mxu0
    %v321 = vadd.f32 0.0, %v320
    %322 = vmatmul.f32.gmra.mxu0 %v301
    %v323 = vpop.f32.mrf.mxu0
    %v324 = vadd.f32 0.0, %v323
    %325 = vdwg.mxu0
    %326 = vrot.lane.b32.xlu0 %v225, 120
    %v327 = vpop.permute.xlu0 %326
    %328 = vrot.lane.b32.xlu0 %v228, 120
    %v329 = vpop.permute.xlu0 %328
    %330 = vrot.lane.b32.xlu0 %v225, 88
    %v331 = vpop.permute.xlu0 %330
    %332 = vrot.lane.b32.xlu0 %v228, 88
    %v333 = vpop.permute.xlu0 %332
    %v334 = vsel %vm236, %v327, 0
    %v336 = vsel %vm236, %v329, 0
    %v338 = vsel %vm236, %v331, 0
    %v340 = vsel %vm236, %v333, 0
    %342 = vmatpush.xpose.msra.mxu0 0.0
    %343 = vmatpush.xpose.msra.mxu0 0.0
    %344 = vmatpush.xpose.msra.mxu0 0.0
    %345 = vmatpush.xpose.msra.mxu0 0.0
    %346 = vmatpush.xpose.msra.mxu0 0.0
    %347 = vmatpush.xpose.msra.mxu0 0.0
    %348 = vmatpush.xpose.msra.mxu0 0.0
    %349 = vmatpush.xpose.msra.mxu0 0.0
    %350 = vmatpush.xpose.msra.mxu0 0.0
    %351 = vmatpush.xpose.msra.mxu0 0.0
    %352 = vmatpush.xpose.msra.mxu0 0.0
    %353 = vmatpush.xpose.msra.mxu0 0.0
    %354 = vmatpush.xpose.msra.mxu0 0.0
    %355 = vmatpush.xpose.msra.mxu0 0.0
    %356 = vmatpush.xpose.msra.mxu0 %v340
    %357 = vmatpush.xpose.msra.mxu0 %v338
    %358 = vmatmul.f32.gmra.mxu0 %v334
    %v359 = vpop.f32.mrf.mxu0
    %v360 = vadd.f32 %v193, %v359
    %361 = vmatmul.f32.gmra.mxu0 %v336
    %v362 = vpop.f32.mrf.mxu0
    %v363 = vadd.f32 %v194, %v362
    %364 = vdwg.mxu0
    %v365 = vsel %vm268, %v360, -inf
    %366 = vmax.xlane.f32.xlu0 %v365
    %v367 = vpop.xlane.xlu0 %366
    %v368 = vsel %vm268, %v363, -inf
    %369 = vmax.xlane.f32.xlu0 %v368
    %v370 = vpop.xlane.xlu0 %369
    %v371 = vsub.f32 %v360, %v367
    %v372 = vsub.f32 %v363, %v370
    %v373 = vmul.f32 %v371, 1.442695
    %v374 = vpow.pop %v373
    %v375 = vmul.f32 %v372, 1.442695
    %v376 = vpow.pop %v375
    %v377 = vsel %vm268, %v374, 0.0
    %378 = vadd.xlane.f32.xlu0 %v377
    %v379 = vpop.xlane.xlu0 %378
    %v380 = vsel %vm268, %v376, 0.0
    %381 = vadd.xlane.f32.xlu0 %v380
    %v382 = vpop.xlane.xlu0 %381
    %v383 = vrcp.pop %v379
    %v384 = vrcp.pop %v382
    %v385 = vmul.f32 %v374, %v383
    %v386 = vmul.f32 %v376, %v384
    %387 = vrot.lane.b32.xlu0 %v225, 56
    %v388 = vpop.permute.xlu0 %387
    %389 = vrot.lane.b32.xlu0 %v228, 56
    %v390 = vpop.permute.xlu0 %389
    %v394 = vsel %vm268, %v385, 0
    %v397 = vsel %vm268, %v386, 0
    %399 = vmatpush.msra.mxu0 0.0
    %400 = vmatpush.msra.mxu0 0.0
    %401 = vmatpush.msra.mxu0 0.0
    %402 = vmatpush.msra.mxu0 0.0
    %403 = vmatpush.msra.mxu0 0.0
    %404 = vmatpush.msra.mxu0 0.0
    %405 = vmatpush.msra.mxu0 0.0
    %406 = vmatpush.msra.mxu0 0.0
    %407 = vmatpush.msra.mxu0 0.0
    %408 = vmatpush.msra.mxu0 0.0
    %409 = vmatpush.msra.mxu0 0.0
    %410 = vmatpush.msra.mxu0 0.0
    %411 = vmatpush.msra.mxu0 0.0
    %412 = vmatpush.msra.mxu0 0.0
    %413 = vmatpush.msra.mxu0 %v390
    %414 = vmatpush.msra.mxu0 %v388
    %415 = vmatmul.f32.gmra.mxu0 %v394
    %v416 = vpop.f32.mrf.mxu0
    %v417 = vadd.f32 0.0, %v416
    %418 = vmatmul.f32.gmra.mxu0 %v397
    %v419 = vpop.f32.mrf.mxu0
    %v420 = vadd.f32 0.0, %v419
    %421 = vdwg.mxu0
    %422 = vrot.lane.b32.xlu0 %v225, 112
    %v423 = vpop.permute.xlu0 %422
    %424 = vrot.lane.b32.xlu0 %v228, 112
    %v425 = vpop.permute.xlu0 %424
    %426 = vrot.lane.b32.xlu0 %v225, 80
    %v427 = vpop.permute.xlu0 %426
    %428 = vrot.lane.b32.xlu0 %v228, 80
    %v429 = vpop.permute.xlu0 %428
    %v430 = vsel %vm236, %v423, 0
    %v432 = vsel %vm236, %v425, 0
    %v434 = vsel %vm236, %v427, 0
    %v436 = vsel %vm236, %v429, 0
    %438 = vmatpush.xpose.msra.mxu0 0.0
    %439 = vmatpush.xpose.msra.mxu0 0.0
    %440 = vmatpush.xpose.msra.mxu0 0.0
    %441 = vmatpush.xpose.msra.mxu0 0.0
    %442 = vmatpush.xpose.msra.mxu0 0.0
    %443 = vmatpush.xpose.msra.mxu0 0.0
    %444 = vmatpush.xpose.msra.mxu0 0.0
    %445 = vmatpush.xpose.msra.mxu0 0.0
    %446 = vmatpush.xpose.msra.mxu0 0.0
    %447 = vmatpush.xpose.msra.mxu0 0.0
    %448 = vmatpush.xpose.msra.mxu0 0.0
    %449 = vmatpush.xpose.msra.mxu0 0.0
    %450 = vmatpush.xpose.msra.mxu0 0.0
    %451 = vmatpush.xpose.msra.mxu0 0.0
    %452 = vmatpush.xpose.msra.mxu0 %v436
    %453 = vmatpush.xpose.msra.mxu0 %v434
    %454 = vmatmul.f32.gmra.mxu0 %v430
    %v455 = vpop.f32.mrf.mxu0
    %v456 = vadd.f32 %v193, %v455
    %457 = vmatmul.f32.gmra.mxu0 %v432
    %v458 = vpop.f32.mrf.mxu0
    %v459 = vadd.f32 %v194, %v458
    %460 = vdwg.mxu0
    %v461 = vsel %vm268, %v456, -inf
    %462 = vmax.xlane.f32.xlu0 %v461
    %v463 = vpop.xlane.xlu0 %462
    %v464 = vsel %vm268, %v459, -inf
    %465 = vmax.xlane.f32.xlu0 %v464
    %v466 = vpop.xlane.xlu0 %465
    %v467 = vsub.f32 %v456, %v463
    %v468 = vsub.f32 %v459, %v466
    %v469 = vmul.f32 %v467, 1.442695
    %v470 = vpow.pop %v469
    %v471 = vmul.f32 %v468, 1.442695
    %v472 = vpow.pop %v471
    %v473 = vsel %vm268, %v470, 0.0
    %474 = vadd.xlane.f32.xlu0 %v473
    %v475 = vpop.xlane.xlu0 %474
    %v476 = vsel %vm268, %v472, 0.0
    %477 = vadd.xlane.f32.xlu0 %v476
    %v478 = vpop.xlane.xlu0 %477
    %v479 = vrcp.pop %v475
    %v480 = vrcp.pop %v478
    %v481 = vmul.f32 %v470, %v479
    %v482 = vmul.f32 %v472, %v480
    %483 = vrot.lane.b32.xlu0 %v225, 48
    %v484 = vpop.permute.xlu0 %483
    %485 = vrot.lane.b32.xlu0 %v228, 48
    %v486 = vpop.permute.xlu0 %485
    %v490 = vsel %vm268, %v481, 0
    %v493 = vsel %vm268, %v482, 0
    %495 = vmatpush.msra.mxu0 0.0
    %496 = vmatpush.msra.mxu0 0.0
    %497 = vmatpush.msra.mxu0 0.0
    %498 = vmatpush.msra.mxu0 0.0
    %499 = vmatpush.msra.mxu0 0.0
    %500 = vmatpush.msra.mxu0 0.0
    %501 = vmatpush.msra.mxu0 0.0
    %502 = vmatpush.msra.mxu0 0.0
    %503 = vmatpush.msra.mxu0 0.0
    %504 = vmatpush.msra.mxu0 0.0
    %505 = vmatpush.msra.mxu0 0.0
    %506 = vmatpush.msra.mxu0 0.0
    %507 = vmatpush.msra.mxu0 0.0
    %508 = vmatpush.msra.mxu0 0.0
    %509 = vmatpush.msra.mxu0 %v486
    %510 = vmatpush.msra.mxu0 %v484
    %511 = vmatmul.f32.gmra.mxu0 %v490
    %v512 = vpop.f32.mrf.mxu0
    %v513 = vadd.f32 0.0, %v512
    %514 = vmatmul.f32.gmra.mxu0 %v493
    %v515 = vpop.f32.mrf.mxu0
    %v516 = vadd.f32 0.0, %v515
    %517 = vdwg.mxu0
    %518 = vrot.lane.b32.xlu0 %v225, 104
    %v519 = vpop.permute.xlu0 %518
    %520 = vrot.lane.b32.xlu0 %v228, 104
    %v521 = vpop.permute.xlu0 %520
    %522 = vrot.lane.b32.xlu0 %v225, 72
    %v523 = vpop.permute.xlu0 %522
    %524 = vrot.lane.b32.xlu0 %v228, 72
    %v525 = vpop.permute.xlu0 %524
    %v526 = vsel %vm236, %v519, 0
    %v528 = vsel %vm236, %v521, 0
    %v530 = vsel %vm236, %v523, 0
    %v532 = vsel %vm236, %v525, 0
    %534 = vmatpush.xpose.msra.mxu0 0.0
    %535 = vmatpush.xpose.msra.mxu0 0.0
    %536 = vmatpush.xpose.msra.mxu0 0.0
    %537 = vmatpush.xpose.msra.mxu0 0.0
    %538 = vmatpush.xpose.msra.mxu0 0.0
    %539 = vmatpush.xpose.msra.mxu0 0.0
    %540 = vmatpush.xpose.msra.mxu0 0.0
    %541 = vmatpush.xpose.msra.mxu0 0.0
    %542 = vmatpush.xpose.msra.mxu0 0.0
    %543 = vmatpush.xpose.msra.mxu0 0.0
    %544 = vmatpush.xpose.msra.mxu0 0.0
    %545 = vmatpush.xpose.msra.mxu0 0.0
    %546 = vmatpush.xpose.msra.mxu0 0.0
    %547 = vmatpush.xpose.msra.mxu0 0.0
    %548 = vmatpush.xpose.msra.mxu0 %v532
    %549 = vmatpush.xpose.msra.mxu0 %v530
    %550 = vmatmul.f32.gmra.mxu0 %v526
    %v551 = vpop.f32.mrf.mxu0
    %v552 = vadd.f32 %v193, %v551
    %553 = vmatmul.f32.gmra.mxu0 %v528
    %v554 = vpop.f32.mrf.mxu0
    %v555 = vadd.f32 %v194, %v554
    %556 = vdwg.mxu0
    %v557 = vsel %vm268, %v552, -inf
    %558 = vmax.xlane.f32.xlu0 %v557
    %v559 = vpop.xlane.xlu0 %558
    %v560 = vsel %vm268, %v555, -inf
    %561 = vmax.xlane.f32.xlu0 %v560
    %v562 = vpop.xlane.xlu0 %561
    %v563 = vsub.f32 %v552, %v559
    %v564 = vsub.f32 %v555, %v562
    %v565 = vmul.f32 %v563, 1.442695
    %v566 = vpow.pop %v565
    %v567 = vmul.f32 %v564, 1.442695
    %v568 = vpow.pop %v567
    %v569 = vsel %vm268, %v566, 0.0
    %570 = vadd.xlane.f32.xlu0 %v569
    %v571 = vpop.xlane.xlu0 %570
    %v572 = vsel %vm268, %v568, 0.0
    %573 = vadd.xlane.f32.xlu0 %v572
    %v574 = vpop.xlane.xlu0 %573
    %v575 = vrcp.pop %v571
    %v576 = vrcp.pop %v574
    %v577 = vmul.f32 %v566, %v575
    %v578 = vmul.f32 %v568, %v576
    %579 = vrot.lane.b32.xlu0 %v225, 40
    %v580 = vpop.permute.xlu0 %579
    %581 = vrot.lane.b32.xlu0 %v228, 40
    %v582 = vpop.permute.xlu0 %581
    %v586 = vsel %vm268, %v577, 0
    %v589 = vsel %vm268, %v578, 0
    %591 = vmatpush.msra.mxu0 0.0
    %592 = vmatpush.msra.mxu0 0.0
    %593 = vmatpush.msra.mxu0 0.0
    %594 = vmatpush.msra.mxu0 0.0
    %595 = vmatpush.msra.mxu0 0.0
    %596 = vmatpush.msra.mxu0 0.0
    %597 = vmatpush.msra.mxu0 0.0
    %598 = vmatpush.msra.mxu0 0.0
    %599 = vmatpush.msra.mxu0 0.0
    %600 = vmatpush.msra.mxu0 0.0
    %601 = vmatpush.msra.mxu0 0.0
    %602 = vmatpush.msra.mxu0 0.0
    %603 = vmatpush.msra.mxu0 0.0
    %604 = vmatpush.msra.mxu0 0.0
    %605 = vmatpush.msra.mxu0 %v582
    %606 = vmatpush.msra.mxu0 %v580
    %607 = vmatmul.f32.gmra.mxu0 %v586
    %v608 = vpop.f32.mrf.mxu0
    %v609 = vadd.f32 0.0, %v608
    %610 = vmatmul.f32.gmra.mxu0 %v589
    %v611 = vpop.f32.mrf.mxu0
    %v612 = vadd.f32 0.0, %v611
    %613 = vdwg.mxu0
    %616 = vrot.lane.b32.xlu0 %v417, 8
    %v617 = vpop.permute.xlu0 %616
    %618 = vrot.lane.b32.xlu0 %v420, 8
    %v619 = vpop.permute.xlu0 %618
    %624 = vrot.lane.b32.xlu0 %v513, 16
    %v625 = vpop.permute.xlu0 %624
    %626 = vrot.lane.b32.xlu0 %v516, 16
    %v627 = vpop.permute.xlu0 %626
    %632 = vrot.lane.b32.xlu0 %v609, 24
    %v633 = vpop.permute.xlu0 %632
    %634 = vrot.lane.b32.xlu0 %v612, 24
    %v635 = vpop.permute.xlu0 %634
    %v638 = vsel %vm236, %v321, %v617
    %v639 = vsel %vm236, %v324, %v619
    %v640 = vsel %vm268, %v638, %v625
    %v641 = vsel %vm268, %v639, %v627
    %vm642 = vcmask 195584
    %v643 = vsel %vm642, %v640, %v633
    %v644 = vsel %vm642, %v641, %v635
    %v645 = vld [vmem:[%s3 + $0x1] sm:$0x1]
    %v646 = vperm.slane %v645, 0
    %651 = vrot.lane.b32.xlu0 %v195, 32
    %v652 = vpop.permute.xlu0 %651
    %653 = vrot.lane.b32.xlu0 %v196, 32
    %v654 = vpop.permute.xlu0 %653
    %655 = vrot.lane.b32.xlu0 %v197, 32
    %v656 = vpop.permute.xlu0 %655
    %657 = vrot.lane.b32.xlu0 %v198, 32
    %v658 = vpop.permute.xlu0 %657
    %v664 = vsel %vm111, %v643, 0
    %v667 = vsel %vm111, %v644, 0
    %669 = vmatpush.msra.mxu0 0.0
    %670 = vmatpush.msra.mxu0 0.0
    %671 = vmatpush.msra.mxu0 0.0
    %672 = vmatpush.msra.mxu0 0.0
    %673 = vmatpush.msra.mxu0 0.0
    %674 = vmatpush.msra.mxu0 0.0
    %675 = vmatpush.msra.mxu0 0.0
    %676 = vmatpush.msra.mxu0 0.0
    %677 = vmatpush.msra.mxu0 0.0
    %678 = vmatpush.msra.mxu0 0.0
    %679 = vmatpush.msra.mxu0 0.0
    %680 = vmatpush.msra.mxu0 0.0
    %681 = vmatpush.msra.mxu0 %v658
    %682 = vmatpush.msra.mxu0 %v656
    %683 = vmatpush.msra.mxu0 %v654
    %684 = vmatpush.msra.mxu0 %v652
    %685 = vmatmul.f32.gmra.mxu0 %v664
    %v686 = vpop.f32.mrf.mxu0
    %v687 = vadd.f32 %v646, %v686
    %688 = vmatmul.f32.gmra.mxu0 %v667
    %v689 = vpop.f32.mrf.mxu0
    %v690 = vadd.f32 %v646, %v689
    %691 = vdwg.mxu0
    %v692 = vadd.f32 %v687, %v175
    %v693 = vadd.f32 %v690, %v176
    %v694 = vld [vmem:[%s3 + $0x2] sm:$0x1]
    %v695 = vld [vmem:[%s3 + $0x3] sm:$0x1]
    %v696 = vsel %vm111, %v692, 0.0
    %697 = vadd.xlane.f32.xlu0 %v696
    %v698 = vpop.xlane.xlu0 %697
    %v699 = vsel %vm111, %v693, 0.0
    %700 = vadd.xlane.f32.xlu0 %v699
    %v701 = vpop.xlane.xlu0 %700
    %v702 = vmul.f32 %v698, %v124
    %v703 = vmul.f32 %v701, %v124
    %v704 = vsub.f32 %v692, %v702
    %v705 = vsub.f32 %v693, %v703
    %v706 = vmul.f32 %v704, %v704
    %v707 = vmul.f32 %v705, %v705
    %v708 = vsel %vm111, %v706, 0.0
    %709 = vadd.xlane.f32.xlu0 %v708
    %v710 = vpop.xlane.xlu0 %709
    %v711 = vsel %vm111, %v707, 0.0
    %712 = vadd.xlane.f32.xlu0 %v711
    %v713 = vpop.xlane.xlu0 %712
    %v714 = vmul.f32 %v710, %v124
    %v715 = vmul.f32 %v713, %v124
    %v716 = vadd.f32 %v714, 1e-12
    %v717 = vadd.f32 %v715, 1e-12
    %v718 = vrsqrt.pop %v716
    %v719 = vmul.f32 %v718, %v716
    %v720 = vmul.f32 %v719, %v718
    %v721 = vmul.f32 0.5, %v720
    %v722 = vsub.f32 1.5, %v721
    %v723 = vmul.f32 %v718, %v722
    %vm724 = vweird.f32 %v716
    %vm725 = vweird.f32 %v718
    %vm726 = vmor %vm724, %vm725
    %v727 = vsel %vm726, %v718, %v723
    %v728 = vrsqrt.pop %v717
    %v729 = vmul.f32 %v728, %v717
    %v730 = vmul.f32 %v729, %v728
    %v731 = vmul.f32 0.5, %v730
    %v732 = vsub.f32 1.5, %v731
    %v733 = vmul.f32 %v728, %v732
    %vm734 = vweird.f32 %v717
    %vm735 = vweird.f32 %v728
    %vm736 = vmor %vm734, %vm735
    %v737 = vsel %vm736, %v728, %v733
    %v738 = vmul.f32 %v704, %v727
    %v739 = vmul.f32 %v705, %v737
    %v740 = vperm.slane %v694, 0
    %v741 = vmul.f32 %v738, %v740
    %v742 = vmul.f32 %v739, %v740
    %v743 = vperm.slane %v695, 0
    %v744 = vadd.f32 %v741, %v743
    %v745 = vadd.f32 %v742, %v743
    %v746 = vld [vmem:[#allocation2 + $0x20] sm:$0xff]
    %v747 = vld [vmem:[#allocation2 + $0x28] sm:$0xff]
    %v748 = vld [vmem:[#allocation2 + $0x30] sm:$0xff]
    %v749 = vld [vmem:[#allocation2 + $0x38] sm:$0xff]
    %v750 = vld [vmem:[%s3 + $0x4] sm:$0x1]
    %v751 = vperm.slane %v750, 0
    %v753 = vsel %vm111, %v744, 0
    %v756 = vsel %vm111, %v745, 0
    %758 = vmatpush.msra.mxu0 0.0
    %759 = vmatpush.msra.mxu0 0.0
    %760 = vmatpush.msra.mxu0 0.0
    %761 = vmatpush.msra.mxu0 0.0
    %762 = vmatpush.msra.mxu0 0.0
    %763 = vmatpush.msra.mxu0 0.0
    %764 = vmatpush.msra.mxu0 0.0
    %765 = vmatpush.msra.mxu0 0.0
    %766 = vmatpush.msra.mxu0 0.0
    %767 = vmatpush.msra.mxu0 0.0
    %768 = vmatpush.msra.mxu0 0.0
    %769 = vmatpush.msra.mxu0 0.0
    %770 = vmatpush.msra.mxu0 %v749
    %771 = vmatpush.msra.mxu0 %v748
    %772 = vmatpush.msra.mxu0 %v747
    %773 = vmatpush.msra.mxu0 %v746
    %774 = vmatmul.f32.gmra.mxu0 %v753
    %v775 = vpop.f32.mrf.mxu0
    %v776 = vadd.f32 %v751, %v775
    %777 = vmatmul.f32.gmra.mxu0 %v756
    %v778 = vpop.f32.mrf.mxu0
    %v779 = vadd.f32 %v751, %v778
    %780 = vdwg.mxu0
    %v781 = vmul.f32 %v776, %v776
    %v782 = vmul.f32 %v779, %v779
    %v783 = vmul.f32 %v776, %v781
    %v784 = vmul.f32 %v779, %v782
    %v785 = vmul.f32 %v783, 0.044715
    %v786 = vmul.f32 %v784, 0.044715
    %v787 = vadd.f32 %v776, %v785
    %v788 = vadd.f32 %v779, %v786
    %v789 = vmul.f32 %v787, 0.7978846
    %v790 = vmul.f32 %v788, 0.7978846
    %v791 = vtanh.pop %v789
    %v792 = vtanh.pop %v790
    %v793 = vadd.f32 %v791, 1.0
    %v794 = vadd.f32 %v792, 1.0
    %v795 = vmul.f32 %v793, 0.5
    %v796 = vmul.f32 %v794, 0.5
    %v797 = vmul.f32 %v776, %v795
    %v798 = vmul.f32 %v779, %v796
    %v799 = vld [vmem:[#allocation2 + $0x20] sm:$0xff]
    %v800 = vld [vmem:[#allocation2 + $0x28] sm:$0xff]
    %v801 = vld [vmem:[#allocation2 + $0x30] sm:$0xff]
    %v802 = vld [vmem:[#allocation2 + $0x38] sm:$0xff]
    %v803 = vld [vmem:[#allocation2 + $0x40] sm:$0xff]
    %v804 = vld [vmem:[#allocation2 + $0x48] sm:$0xff]
    %v805 = vld [vmem:[#allocation2 + $0x50] sm:$0xff]
    %v806 = vld [vmem:[#allocation2 + $0x58] sm:$0xff]
    %v807 = vld [vmem:[%s3 + $0x5] sm:$0x1]
    %v808 = vperm.slane %v807, 0
    %817 = vrot.lane.b32.xlu0 %v799, 64
    %v818 = vpop.permute.xlu0 %817
    %819 = vrot.lane.b32.xlu0 %v800, 64
    %v820 = vpop.permute.xlu0 %819
    %821 = vrot.lane.b32.xlu0 %v801, 64
    %v822 = vpop.permute.xlu0 %821
    %823 = vrot.lane.b32.xlu0 %v802, 64
    %v824 = vpop.permute.xlu0 %823
    %825 = vrot.lane.b32.xlu0 %v803, 64
    %v826 = vpop.permute.xlu0 %825
    %827 = vrot.lane.b32.xlu0 %v804, 64
    %v828 = vpop.permute.xlu0 %827
    %829 = vrot.lane.b32.xlu0 %v805, 64
    %v830 = vpop.permute.xlu0 %829
    %831 = vrot.lane.b32.xlu0 %v806, 64
    %v832 = vpop.permute.xlu0 %831
    %vm841 = vcmask 523264
    %v843 = vsel %vm841, %v797, 0
    %v846 = vsel %vm841, %v798, 0
    %848 = vmatpush.msra.mxu0 0.0
    %849 = vmatpush.msra.mxu0 0.0
    %850 = vmatpush.msra.mxu0 0.0
    %851 = vmatpush.msra.mxu0 0.0
    %852 = vmatpush.msra.mxu0 0.0
    %853 = vmatpush.msra.mxu0 0.0
    %854 = vmatpush.msra.mxu0 0.0
    %855 = vmatpush.msra.mxu0 0.0
    %856 = vmatpush.msra.mxu0 %v832
    %857 = vmatpush.msra.mxu0 %v830
    %858 = vmatpush.msra.mxu0 %v828
    %859 = vmatpush.msra.mxu0 %v826
    %860 = vmatpush.msra.mxu0 %v824
    %861 = vmatpush.msra.mxu0 %v822
    %862 = vmatpush.msra.mxu0 %v820
    %863 = vmatpush.msra.mxu0 %v818
    %864 = vmatmul.f32.gmra.mxu0 %v843
    %v865 = vpop.f32.mrf.mxu0
    %v866 = vadd.f32 %v808, %v865
    %867 = vmatmul.f32.gmra.mxu0 %v846
    %v868 = vpop.f32.mrf.mxu0
    %v869 = vadd.f32 %v808, %v868
    %870 = vdwg.mxu0
    %v871 = vadd.f32 %v866, %v744
    %v872 = vadd.f32 %v869, %v745
    %v873 = vld [vmem:[%s3 + $0x6] sm:$0x1]
    %v874 = vld [vmem:[%s3 + $0x7] sm:$0x1]
    %v875 = vsel %vm111, %v871, 0.0
    %876 = vadd.xlane.f32.xlu0 %v875
    %v877 = vpop.xlane.xlu0 %876
    %v878 = vsel %vm111, %v872, 0.0
    %879 = vadd.xlane.f32.xlu0 %v878
    %v880 = vpop.xlane.xlu0 %879
    %v881 = vmul.f32 %v877, %v124
    %v882 = vmul.f32 %v880, %v124
    %v883 = vsub.f32 %v871, %v881
    %v884 = vsub.f32 %v872, %v882
    %v885 = vmul.f32 %v883, %v883
    %v886 = vmul.f32 %v884, %v884
    %v887 = vsel %vm111, %v885, 0.0
    %888 = vadd.xlane.f32.xlu0 %v887
    %v889 = vpop.xlane.xlu0 %888
    %v890 = vsel %vm111, %v886, 0.0
    %891 = vadd.xlane.f32.xlu0 %v890
    %v892 = vpop.xlane.xlu0 %891
    %v893 = vmul.f32 %v889, %v124
    %v894 = vmul.f32 %v892, %v124
    %v895 = vadd.f32 %v893, 1e-12
    %v896 = vadd.f32 %v894, 1e-12
    %v897 = vrsqrt.pop %v895
    %v898 = vmul.f32 %v897, %v895
    %v899 = vmul.f32 %v898, %v897
    %v900 = vmul.f32 0.5, %v899
    %v901 = vsub.f32 1.5, %v900
    %v902 = vmul.f32 %v897, %v901
    %vm903 = vweird.f32 %v895
    %vm904 = vweird.f32 %v897
    %vm905 = vmor %vm903, %vm904
    %v906 = vsel %vm905, %v897, %v902
    %v907 = vrsqrt.pop %v896
    %v908 = vmul.f32 %v907, %v896
    %v909 = vmul.f32 %v908, %v907
    %v910 = vmul.f32 0.5, %v909
    %v911 = vsub.f32 1.5, %v910
    %v912 = vmul.f32 %v907, %v911
    %vm913 = vweird.f32 %v896
    %vm914 = vweird.f32 %v907
    %vm915 = vmor %vm913, %vm914
    %v916 = vsel %vm915, %v907, %v912
    %v917 = vmul.f32 %v883, %v906
    %v918 = vmul.f32 %v884, %v916
    %v919 = vperm.slane %v873, 0
    %v920 = vmul.f32 %v917, %v919
    %v921 = vmul.f32 %v918, %v919
    %v922 = vperm.slane %v874, 0
    %v923 = vadd.f32 %v920, %v922
    %v924 = vadd.f32 %v921, %v922
    %s925 = scalar_lea.vmem [#allocation2], 96
    %v926 = vld [vmem:[%s925] sm:$0xff]
    %v927 = vld [vmem:[%s925 + $0x8] sm:$0xff]
    %v928 = vld [vmem:[%s925 + $0x10] sm:$0xff]
    %v929 = vld [vmem:[%s925 + $0x18] sm:$0xff]
    %s930 = scalar_lea.vmem %s3, 8
    %v931 = vld [vmem:[%s930] sm:$0x1]
    %v932 = vperm.slane %v931, 0
    %v934 = vsel %vm111, %v923, 0
    %v937 = vsel %vm111, %v924, 0
    %939 = vmatpush.msra.mxu0 0.0
    %940 = vmatpush.msra.mxu0 0.0
    %941 = vmatpush.msra.mxu0 0.0
    %942 = vmatpush.msra.mxu0 0.0
    %943 = vmatpush.msra.mxu0 0.0
    %944 = vmatpush.msra.mxu0 0.0
    %945 = vmatpush.msra.mxu0 0.0
    %946 = vmatpush.msra.mxu0 0.0
    %947 = vmatpush.msra.mxu0 0.0
    %948 = vmatpush.msra.mxu0 0.0
    %949 = vmatpush.msra.mxu0 0.0
    %950 = vmatpush.msra.mxu0 0.0
    %951 = vmatpush.msra.mxu0 %v929
    %952 = vmatpush.msra.mxu0 %v928
    %953 = vmatpush.msra.mxu0 %v927
    %954 = vmatpush.msra.mxu0 %v926
    %955 = vmatmul.f32.gmra.mxu0 %v934
    %v956 = vpop.f32.mrf.mxu0
    %v957 = vadd.f32 %v932, %v956
    %958 = vmatmul.f32.gmra.mxu0 %v937
    %v959 = vpop.f32.mrf.mxu0
    %v960 = vadd.f32 %v932, %v959
    %961 = vdwg.mxu0
    %964 = vrot.lane.b32.xlu0 %v957, 96
    %v965 = vpop.permute.xlu0 %964
    %966 = vrot.lane.b32.xlu0 %v960, 96
    %v967 = vpop.permute.xlu0 %966
    %v968 = vsel %vm236, %v957, 0
    %v970 = vsel %vm236, %v960, 0
    %v972 = vsel %vm236, %v965, 0
    %v974 = vsel %vm236, %v967, 0
    %976 = vmatpush.xpose.msra.mxu0 0.0
    %977 = vmatpush.xpose.msra.mxu0 0.0
    %978 = vmatpush.xpose.msra.mxu0 0.0
    %979 = vmatpush.xpose.msra.mxu0 0.0
    %980 = vmatpush.xpose.msra.mxu0 0.0
    %981 = vmatpush.xpose.msra.mxu0 0.0
    %982 = vmatpush.xpose.msra.mxu0 0.0
    %983 = vmatpush.xpose.msra.mxu0 0.0
    %984 = vmatpush.xpose.msra.mxu0 0.0
    %985 = vmatpush.xpose.msra.mxu0 0.0
    %986 = vmatpush.xpose.msra.mxu0 0.0
    %987 = vmatpush.xpose.msra.mxu0 0.0
    %988 = vmatpush.xpose.msra.mxu0 0.0
    %989 = vmatpush.xpose.msra.mxu0 0.0
    %990 = vmatpush.xpose.msra.mxu0 %v974
    %991 = vmatpush.xpose.msra.mxu0 %v972
    %992 = vmatmul.f32.gmra.mxu0 %v968
    %v993 = vpop.f32.mrf.mxu0
    %v994 = vadd.f32 %v193, %v993
    %995 = vmatmul.f32.gmra.mxu0 %v970
    %v996 = vpop.f32.mrf.mxu0
    %v997 = vadd.f32 %v194, %v996
    %998 = vdwg.mxu0
    %v999 = vsel %vm268, %v994, -inf
    %1000 = vmax.xlane.f32.xlu0 %v999
    %v1001 = vpop.xlane.xlu0 %1000
    %v1002 = vsel %vm268, %v997, -inf
    %1003 = vmax.xlane.f32.xlu0 %v1002
    %v1004 = vpop.xlane.xlu0 %1003
    %v1005 = vsub.f32 %v994, %v1001
    %v1006 = vsub.f32 %v997, %v1004
    %v1007 = vmul.f32 %v1005, 1.442695
    %v1008 = vpow.pop %v1007
    %v1009 = vmul.f32 %v1006, 1.442695
    %v1010 = vpow.pop %v1009
    %v1011 = vsel %vm268, %v1008, 0.0
    %1012 = vadd.xlane.f32.xlu0 %v1011
    %v1013 = vpop.xlane.xlu0 %1012
    %v1014 = vsel %vm268, %v1010, 0.0
    %1015 = vadd.xlane.f32.xlu0 %v1014
    %v1016 = vpop.xlane.xlu0 %1015
    %v1017 = vrcp.pop %v1013
    %v1018 = vrcp.pop %v1016
    %v1019 = vmul.f32 %v1008, %v1017
    %v1020 = vmul.f32 %v1010, %v1018
    %1021 = vrot.lane.b32.xlu0 %v957, 64
    %v1022 = vpop.permute.xlu0 %1021
    %1023 = vrot.lane.b32.xlu0 %v960, 64
    %v1024 = vpop.permute.xlu0 %1023
    %v1028 = vsel %vm268, %v1019, 0
    %v1031 = vsel %vm268, %v1020, 0
    %1033 = vmatpush.msra.mxu0 0.0
    %1034 = vmatpush.msra.mxu0 0.0
    %1035 = vmatpush.msra.mxu0 0.0
    %1036 = vmatpush.msra.mxu0 0.0
    %1037 = vmatpush.msra.mxu0 0.0
    %1038 = vmatpush.msra.mxu0 0.0
    %1039 = vmatpush.msra.mxu0 0.0
    %1040 = vmatpush.msra.mxu0 0.0
    %1041 = vmatpush.msra.mxu0 0.0
    %1042 = vmatpush.msra.mxu0 0.0
    %1043 = vmatpush.msra.mxu0 0.0
    %1044 = vmatpush.msra.mxu0 0.0
    %1045 = vmatpush.msra.mxu0 0.0
    %1046 = vmatpush.msra.mxu0 0.0
    %1047 = vmatpush.msra.mxu0 %v1024
    %1048 = vmatpush.msra.mxu0 %v1022
    %1049 = vmatmul.f32.gmra.mxu0 %v1028
    %v1050 = vpop.f32.mrf.mxu0
    %v1051 = vadd.f32 0.0, %v1050
    %1052 = vmatmul.f32.gmra.mxu0 %v1031
    %v1053 = vpop.f32.mrf.mxu0
    %v1054 = vadd.f32 0.0, %v1053
    %1055 = vdwg.mxu0
    %1056 = vrot.lane.b32.xlu0 %v957, 120
    %v1057 = vpop.permute.xlu0 %1056
    %1058 = vrot.lane.b32.xlu0 %v960, 120
    %v1059 = vpop.permute.xlu0 %1058
    %1060 = vrot.lane.b32.xlu0 %v957, 88
    %v1061 = vpop.permute.xlu0 %1060
    %1062 = vrot.lane.b32.xlu0 %v960, 88
    %v1063 = vpop.permute.xlu0 %1062
    %v1064 = vsel %vm236, %v1057, 0
    %v1066 = vsel %vm236, %v1059, 0
    %v1068 = vsel %vm236, %v1061, 0
    %v1070 = vsel %vm236, %v1063, 0
    %1072 = vmatpush.xpose.msra.mxu0 0.0
    %1073 = vmatpush.xpose.msra.mxu0 0.0
    %1074 = vmatpush.xpose.msra.mxu0 0.0
    %1075 = vmatpush.xpose.msra.mxu0 0.0
    %1076 = vmatpush.xpose.msra.mxu0 0.0
    %1077 = vmatpush.xpose.msra.mxu0 0.0
    %1078 = vmatpush.xpose.msra.mxu0 0.0
    %1079 = vmatpush.xpose.msra.mxu0 0.0
    %1080 = vmatpush.xpose.msra.mxu0 0.0
    %1081 = vmatpush.xpose.msra.mxu0 0.0
    %1082 = vmatpush.xpose.msra.mxu0 0.0
    %1083 = vmatpush.xpose.msra.mxu0 0.0
    %1084 = vmatpush.xpose.msra.mxu0 0.0
    %1085 = vmatpush.xpose.msra.mxu0 0.0
    %1086 = vmatpush.xpose.msra.mxu0 %v1070
    %1087 = vmatpush.xpose.msra.mxu0 %v1068
    %1088 = vmatmul.f32.gmra.mxu0 %v1064
    %v1089 = vpop.f32.mrf.mxu0
    %v1090 = vadd.f32 %v193, %v1089
    %1091 = vmatmul.f32.gmra.mxu0 %v1066
    %v1092 = vpop.f32.mrf.mxu0
    %v1093 = vadd.f32 %v194, %v1092
    %1094 = vdwg.mxu0
    %v1095 = vsel %vm268, %v1090, -inf
    %1096 = vmax.xlane.f32.xlu0 %v1095
    %v1097 = vpop.xlane.xlu0 %1096
    %v1098 = vsel %vm268, %v1093, -inf
    %1099 = vmax.xlane.f32.xlu0 %v1098
    %v1100 = vpop.xlane.xlu0 %1099
    %v1101 = vsub.f32 %v1090, %v1097
    %v1102 = vsub.f32 %v1093, %v1100
    %v1103 = vmul.f32 %v1101, 1.442695
    %v1104 = vpow.pop %v1103
    %v1105 = vmul.f32 %v1102, 1.442695
    %v1106 = vpow.pop %v1105
    %v1107 = vsel %vm268, %v1104, 0.0
    %1108 = vadd.xlane.f32.xlu0 %v1107
    %v1109 = vpop.xlane.xlu0 %1108
    %v1110 = vsel %vm268, %v1106, 0.0
    %1111 = vadd.xlane.f32.xlu0 %v1110
    %v1112 = vpop.xlane.xlu0 %1111
    %v1113 = vrcp.pop %v1109
    %v1114 = vrcp.pop %v1112
    %v1115 = vmul.f32 %v1104, %v1113
    %v1116 = vmul.f32 %v1106, %v1114
    %1117 = vrot.lane.b32.xlu0 %v957, 56
    %v1118 = vpop.permute.xlu0 %1117
    %1119 = vrot.lane.b32.xlu0 %v960, 56
    %v1120 = vpop.permute.xlu0 %1119
    %v1124 = vsel %vm268, %v1115, 0
    %v1127 = vsel %vm268, %v1116, 0
    %1129 = vmatpush.msra.mxu0 0.0
    %1130 = vmatpush.msra.mxu0 0.0
    %1131 = vmatpush.msra.mxu0 0.0
    %1132 = vmatpush.msra.mxu0 0.0
    %1133 = vmatpush.msra.mxu0 0.0
    %1134 = vmatpush.msra.mxu0 0.0
    %1135 = vmatpush.msra.mxu0 0.0
    %1136 = vmatpush.msra.mxu0 0.0
    %1137 = vmatpush.msra.mxu0 0.0
    %1138 = vmatpush.msra.mxu0 0.0
    %1139 = vmatpush.msra.mxu0 0.0
    %1140 = vmatpush.msra.mxu0 0.0
    %1141 = vmatpush.msra.mxu0 0.0
    %1142 = vmatpush.msra.mxu0 0.0
    %1143 = vmatpush.msra.mxu0 %v1120
    %1144 = vmatpush.msra.mxu0 %v1118
    %1145 = vmatmul.f32.gmra.mxu0 %v1124
    %v1146 = vpop.f32.mrf.mxu0
    %v1147 = vadd.f32 0.0, %v1146
    %1148 = vmatmul.f32.gmra.mxu0 %v1127
    %v1149 = vpop.f32.mrf.mxu0
    %v1150 = vadd.f32 0.0, %v1149
    %1151 = vdwg.mxu0
    %1152 = vrot.lane.b32.xlu0 %v957, 112
    %v1153 = vpop.permute.xlu0 %1152
    %1154 = vrot.lane.b32.xlu0 %v960, 112
    %v1155 = vpop.permute.xlu0 %1154
    %1156 = vrot.lane.b32.xlu0 %v957, 80
    %v1157 = vpop.permute.xlu0 %1156
    %1158 = vrot.lane.b32.xlu0 %v960, 80
    %v1159 = vpop.permute.xlu0 %1158
    %v1160 = vsel %vm236, %v1153, 0
    %v1162 = vsel %vm236, %v1155, 0
    %v1164 = vsel %vm236, %v1157, 0
    %v1166 = vsel %vm236, %v1159, 0
    %1168 = vmatpush.xpose.msra.mxu0 0.0
    %1169 = vmatpush.xpose.msra.mxu0 0.0
    %1170 = vmatpush.xpose.msra.mxu0 0.0
    %1171 = vmatpush.xpose.msra.mxu0 0.0
    %1172 = vmatpush.xpose.msra.mxu0 0.0
    %1173 = vmatpush.xpose.msra.mxu0 0.0
    %1174 = vmatpush.xpose.msra.mxu0 0.0
    %1175 = vmatpush.xpose.msra.mxu0 0.0
    %1176 = vmatpush.xpose.msra.mxu0 0.0
    %1177 = vmatpush.xpose.msra.mxu0 0.0
    %1178 = vmatpush.xpose.msra.mxu0 0.0
    %1179 = vmatpush.xpose.msra.mxu0 0.0
    %1180 = vmatpush.xpose.msra.mxu0 0.0
    %1181 = vmatpush.xpose.msra.mxu0 0.0
    %1182 = vmatpush.xpose.msra.mxu0 %v1166
    %1183 = vmatpush.xpose.msra.mxu0 %v1164
    %1184 = vmatmul.f32.gmra.mxu0 %v1160
    %v1185 = vpop.f32.mrf.mxu0
    %v1186 = vadd.f32 %v193, %v1185
    %1187 = vmatmul.f32.gmra.mxu0 %v1162
    %v1188 = vpop.f32.mrf.mxu0
    %v1189 = vadd.f32 %v194, %v1188
    %1190 = vdwg.mxu0
    %v1191 = vsel %vm268, %v1186, -inf
    %1192 = vmax.xlane.f32.xlu0 %v1191
    %v1193 = vpop.xlane.xlu0 %1192
    %v1194 = vsel %vm268, %v1189, -inf
    %1195 = vmax.xlane.f32.xlu0 %v1194
    %v1196 = vpop.xlane.xlu0 %1195
    %v1197 = vsub.f32 %v1186, %v1193
    %v1198 = vsub.f32 %v1189, %v1196
    %v1199 = vmul.f32 %v1197, 1.442695
    %v1200 = vpow.pop %v1199
    %v1201 = vmul.f32 %v1198, 1.442695
    %v1202 = vpow.pop %v1201
    %v1203 = vsel %vm268, %v1200, 0.0
    %1204 = vadd.xlane.f32.xlu0 %v1203
    %v1205 = vpop.xlane.xlu0 %1204
    %v1206 = vsel %vm268, %v1202, 0.0
    %1207 = vadd.xlane.f32.xlu0 %v1206
    %v1208 = vpop.xlane.xlu0 %1207
    %v1209 = vrcp.pop %v1205
    %v1210 = vrcp.pop %v1208
    %v1211 = vmul.f32 %v1200, %v1209
    %v1212 = vmul.f32 %v1202, %v1210
    %1213 = vrot.lane.b32.xlu0 %v957, 48
    %v1214 = vpop.permute.xlu0 %1213
    %1215 = vrot.lane.b32.xlu0 %v960, 48
    %v1216 = vpop.permute.xlu0 %1215
    %v1220 = vsel %vm268, %v1211, 0
    %v1223 = vsel %vm268, %v1212, 0
    %1225 = vmatpush.msra.mxu0 0.0
    %1226 = vmatpush.msra.mxu0 0.0
    %1227 = vmatpush.msra.mxu0 0.0
    %1228 = vmatpush.msra.mxu0 0.0
    %1229 = vmatpush.msra.mxu0 0.0
    %1230 = vmatpush.msra.mxu0 0.0
    %1231 = vmatpush.msra.mxu0 0.0
    %1232 = vmatpush.msra.mxu0 0.0
    %1233 = vmatpush.msra.mxu0 0.0
    %1234 = vmatpush.msra.mxu0 0.0
    %1235 = vmatpush.msra.mxu0 0.0
    %1236 = vmatpush.msra.mxu0 0.0
    %1237 = vmatpush.msra.mxu0 0.0
    %1238 = vmatpush.msra.mxu0 0.0
    %1239 = vmatpush.msra.mxu0 %v1216
    %1240 = vmatpush.msra.mxu0 %v1214
    %1241 = vmatmul.f32.gmra.mxu0 %v1220
    %v1242 = vpop.f32.mrf.mxu0
    %v1243 = vadd.f32 0.0, %v1242
    %1244 = vmatmul.f32.gmra.mxu0 %v1223
    %v1245 = vpop.f32.mrf.mxu0
    %v1246 = vadd.f32 0.0, %v1245
    %1247 = vdwg.mxu0
    %1248 = vrot.lane.b32.xlu0 %v957, 104
    %v1249 = vpop.permute.xlu0 %1248
    %1250 = vrot.lane.b32.xlu0 %v960, 104
    %v1251 = vpop.permute.xlu0 %1250
    %1252 = vrot.lane.b32.xlu0 %v957, 72
    %v1253 = vpop.permute.xlu0 %1252
    %1254 = vrot.lane.b32.xlu0 %v960, 72
    %v1255 = vpop.permute.xlu0 %1254
    %v1256 = vsel %vm236, %v1249, 0
    %v1258 = vsel %vm236, %v1251, 0
    %v1260 = vsel %vm236, %v1253, 0
    %v1262 = vsel %vm236, %v1255, 0
    %1264 = vmatpush.xpose.msra.mxu0 0.0
    %1265 = vmatpush.xpose.msra.mxu0 0.0
    %1266 = vmatpush.xpose.msra.mxu0 0.0
    %1267 = vmatpush.xpose.msra.mxu0 0.0
    %1268 = vmatpush.xpose.msra.mxu0 0.0
    %1269 = vmatpush.xpose.msra.mxu0 0.0
    %1270 = vmatpush.xpose.msra.mxu0 0.0
    %1271 = vmatpush.xpose.msra.mxu0 0.0
    %1272 = vmatpush.xpose.msra.mxu0 0.0
    %1273 = vmatpush.xpose.msra.mxu0 0.0
    %1274 = vmatpush.xpose.msra.mxu0 0.0
    %1275 = vmatpush.xpose.msra.mxu0 0.0
    %1276 = vmatpush.xpose.msra.mxu0 0.0
    %1277 = vmatpush.xpose.msra.mxu0 0.0
    %1278 = vmatpush.xpose.msra.mxu0 %v1262
    %1279 = vmatpush.xpose.msra.mxu0 %v1260
    %1280 = vmatmul.f32.gmra.mxu0 %v1256
    %v1281 = vpop.f32.mrf.mxu0
    %v1282 = vadd.f32 %v193, %v1281
    %1283 = vmatmul.f32.gmra.mxu0 %v1258
    %v1284 = vpop.f32.mrf.mxu0
    %v1285 = vadd.f32 %v194, %v1284
    %1286 = vdwg.mxu0
    %v1287 = vsel %vm268, %v1282, -inf
    %1288 = vmax.xlane.f32.xlu0 %v1287
    %v1289 = vpop.xlane.xlu0 %1288
    %v1290 = vsel %vm268, %v1285, -inf
    %1291 = vmax.xlane.f32.xlu0 %v1290
    %v1292 = vpop.xlane.xlu0 %1291
    %v1293 = vsub.f32 %v1282, %v1289
    %v1294 = vsub.f32 %v1285, %v1292
    %v1295 = vmul.f32 %v1293, 1.442695
    %v1296 = vpow.pop %v1295
    %v1297 = vmul.f32 %v1294, 1.442695
    %v1298 = vpow.pop %v1297
    %v1299 = vsel %vm268, %v1296, 0.0
    %1300 = vadd.xlane.f32.xlu0 %v1299
    %v1301 = vpop.xlane.xlu0 %1300
    %v1302 = vsel %vm268, %v1298, 0.0
    %1303 = vadd.xlane.f32.xlu0 %v1302
    %v1304 = vpop.xlane.xlu0 %1303
    %v1305 = vrcp.pop %v1301
    %v1306 = vrcp.pop %v1304
    %v1307 = vmul.f32 %v1296, %v1305
    %v1308 = vmul.f32 %v1298, %v1306
    %1309 = vrot.lane.b32.xlu0 %v957, 40
    %v1310 = vpop.permute.xlu0 %1309
    %1311 = vrot.lane.b32.xlu0 %v960, 40
    %v1312 = vpop.permute.xlu0 %1311
    %v1316 = vsel %vm268, %v1307, 0
    %v1319 = vsel %vm268, %v1308, 0
    %1321 = vmatpush.msra.mxu0 0.0
    %1322 = vmatpush.msra.mxu0 0.0
    %1323 = vmatpush.msra.mxu0 0.0
    %1324 = vmatpush.msra.mxu0 0.0
    %1325 = vmatpush.msra.mxu0 0.0
    %1326 = vmatpush.msra.mxu0 0.0
    %1327 = vmatpush.msra.mxu0 0.0
    %1328 = vmatpush.msra.mxu0 0.0
    %1329 = vmatpush.msra.mxu0 0.0
    %1330 = vmatpush.msra.mxu0 0.0
    %1331 = vmatpush.msra.mxu0 0.0
    %1332 = vmatpush.msra.mxu0 0.0
    %1333 = vmatpush.msra.mxu0 0.0
    %1334 = vmatpush.msra.mxu0 0.0
    %1335 = vmatpush.msra.mxu0 %v1312
    %1336 = vmatpush.msra.mxu0 %v1310
    %1337 = vmatmul.f32.gmra.mxu0 %v1316
    %v1338 = vpop.f32.mrf.mxu0
    %v1339 = vadd.f32 0.0, %v1338
    %1340 = vmatmul.f32.gmra.mxu0 %v1319
    %v1341 = vpop.f32.mrf.mxu0
    %v1342 = vadd.f32 0.0, %v1341
    %1343 = vdwg.mxu0
    %1346 = vrot.lane.b32.xlu0 %v1147, 8
    %v1347 = vpop.permute.xlu0 %1346
    %1348 = vrot.lane.b32.xlu0 %v1150, 8
    %v1349 = vpop.permute.xlu0 %1348
    %1354 = vrot.lane.b32.xlu0 %v1243, 16
    %v1355 = vpop.permute.xlu0 %1354
    %1356 = vrot.lane.b32.xlu0 %v1246, 16
    %v1357 = vpop.permute.xlu0 %1356
    %1362 = vrot.lane.b32.xlu0 %v1339, 24
    %v1363 = vpop.permute.xlu0 %1362
    %1364 = vrot.lane.b32.xlu0 %v1342, 24
    %v1365 = vpop.permute.xlu0 %1364
    %v1368 = vsel %vm236, %v1051, %v1347
    %v1369 = vsel %vm236, %v1054, %v1349
    %v1370 = vsel %vm268, %v1368, %v1355
    %v1371 = vsel %vm268, %v1369, %v1357
    %v1372 = vsel %vm642, %v1370, %v1363
    %v1373 = vsel %vm642, %v1371, %v1365
    %v1374 = vld [vmem:[%s930 + $0x1] sm:$0x1]
    %v1375 = vperm.slane %v1374, 0
    %1380 = vrot.lane.b32.xlu0 %v926, 32
    %v1381 = vpop.permute.xlu0 %1380
    %1382 = vrot.lane.b32.xlu0 %v927, 32
    %v1383 = vpop.permute.xlu0 %1382
    %1384 = vrot.lane.b32.xlu0 %v928, 32
    %v1385 = vpop.permute.xlu0 %1384
    %1386 = vrot.lane.b32.xlu0 %v929, 32
    %v1387 = vpop.permute.xlu0 %1386
    %v1393 = vsel %vm111, %v1372, 0
    %v1396 = vsel %vm111, %v1373, 0
    %1398 = vmatpush.msra.mxu0 0.0
    %1399 = vmatpush.msra.mxu0 0.0
    %1400 = vmatpush.msra.mxu0 0.0
    %1401 = vmatpush.msra.mxu0 0.0
    %1402 = vmatpush.msra.mxu0 0.0
    %1403 = vmatpush.msra.mxu0 0.0
    %1404 = vmatpush.msra.mxu0 0.0
    %1405 = vmatpush.msra.mxu0 0.0
    %1406 = vmatpush.msra.mxu0 0.0
    %1407 = vmatpush.msra.mxu0 0.0
    %1408 = vmatpush.msra.mxu0 0.0
    %1409 = vmatpush.msra.mxu0 0.0
    %1410 = vmatpush.msra.mxu0 %v1387
    %1411 = vmatpush.msra.mxu0 %v1385
    %1412 = vmatpush.msra.mxu0 %v1383
    %1413 = vmatpush.msra.mxu0 %v1381
    %1414 = vmatmul.f32.gmra.mxu0 %v1393
    %v1415 = vpop.f32.mrf.mxu0
    %v1416 = vadd.f32 %v1375, %v1415
    %1417 = vmatmul.f32.gmra.mxu0 %v1396
    %v1418 = vpop.f32.mrf.mxu0
    %v1419 = vadd.f32 %v1375, %v1418
    %1420 = vdwg.mxu0
    %v1421 = vadd.f32 %v1416, %v923
    %v1422 = vadd.f32 %v1419, %v924
    %v1423 = vld [vmem:[%s930 + $0x2] sm:$0x1]
    %v1424 = vld [vmem:[%s930 + $0x3] sm:$0x1]
    %v1425 = vsel %vm111, %v1421, 0.0
    %1426 = vadd.xlane.f32.xlu0 %v1425
    %v1427 = vpop.xlane.xlu0 %1426
    %v1428 = vsel %vm111, %v1422, 0.0
    %1429 = vadd.xlane.f32.xlu0 %v1428
    %v1430 = vpop.xlane.xlu0 %1429
    %v1431 = vmul.f32 %v1427, %v124
    %v1432 = vmul.f32 %v1430, %v124
    %v1433 = vsub.f32 %v1421, %v1431
    %v1434 = vsub.f32 %v1422, %v1432
    %v1435 = vmul.f32 %v1433, %v1433
    %v1436 = vmul.f32 %v1434, %v1434
    %v1437 = vsel %vm111, %v1435, 0.0
    %1438 = vadd.xlane.f32.xlu0 %v1437
    %v1439 = vpop.xlane.xlu0 %1438
    %v1440 = vsel %vm111, %v1436, 0.0
    %1441 = vadd.xlane.f32.xlu0 %v1440
    %v1442 = vpop.xlane.xlu0 %1441
    %v1443 = vmul.f32 %v1439, %v124
    %v1444 = vmul.f32 %v1442, %v124
    %v1445 = vadd.f32 %v1443, 1e-12
    %v1446 = vadd.f32 %v1444, 1e-12
    %v1447 = vrsqrt.pop %v1445
    %v1448 = vmul.f32 %v1447, %v1445
    %v1449 = vmul.f32 %v1448, %v1447
    %v1450 = vmul.f32 0.5, %v1449
    %v1451 = vsub.f32 1.5, %v1450
    %v1452 = vmul.f32 %v1447, %v1451
    %vm1453 = vweird.f32 %v1445
    %vm1454 = vweird.f32 %v1447
    %vm1455 = vmor %vm1453, %vm1454
    %v1456 = vsel %vm1455, %v1447, %v1452
    %v1457 = vrsqrt.pop %v1446
    %v1458 = vmul.f32 %v1457, %v1446
    %v1459 = vmul.f32 %v1458, %v1457
    %v1460 = vmul.f32 0.5, %v1459
    %v1461 = vsub.f32 1.5, %v1460
    %v1462 = vmul.f32 %v1457, %v1461
    %vm1463 = vweird.f32 %v1446
    %vm1464 = vweird.f32 %v1457
    %vm1465 = vmor %vm1463, %vm1464
    %v1466 = vsel %vm1465, %v1457, %v1462
    %v1467 = vmul.f32 %v1433, %v1456
    %v1468 = vmul.f32 %v1434, %v1466
    %v1469 = vperm.slane %v1423, 0
    %v1470 = vmul.f32 %v1467, %v1469
    %v1471 = vmul.f32 %v1468, %v1469
    %v1472 = vperm.slane %v1424, 0
    %v1473 = vadd.f32 %v1470, %v1472
    %v1474 = vadd.f32 %v1471, %v1472
    %v1475 = vld [vmem:[%s925 + $0x20] sm:$0xff]
    %v1476 = vld [vmem:[%s925 + $0x28] sm:$0xff]
    %v1477 = vld [vmem:[%s925 + $0x30] sm:$0xff]
    %v1478 = vld [vmem:[%s925 + $0x38] sm:$0xff]
    %v1479 = vld [vmem:[%s930 + $0x4] sm:$0x1]
    %v1480 = vperm.slane %v1479, 0
    %v1482 = vsel %vm111, %v1473, 0
    %v1485 = vsel %vm111, %v1474, 0
    %1487 = vmatpush.msra.mxu0 0.0
    %1488 = vmatpush.msra.mxu0 0.0
    %1489 = vmatpush.msra.mxu0 0.0
    %1490 = vmatpush.msra.mxu0 0.0
    %1491 = vmatpush.msra.mxu0 0.0
    %1492 = vmatpush.msra.mxu0 0.0
    %1493 = vmatpush.msra.mxu0 0.0
    %1494 = vmatpush.msra.mxu0 0.0
    %1495 = vmatpush.msra.mxu0 0.0
    %1496 = vmatpush.msra.mxu0 0.0
    %1497 = vmatpush.msra.mxu0 0.0
    %1498 = vmatpush.msra.mxu0 0.0
    %1499 = vmatpush.msra.mxu0 %v1478
    %1500 = vmatpush.msra.mxu0 %v1477
    %1501 = vmatpush.msra.mxu0 %v1476
    %1502 = vmatpush.msra.mxu0 %v1475
    %1503 = vmatmul.f32.gmra.mxu0 %v1482
    %v1504 = vpop.f32.mrf.mxu0
    %v1505 = vadd.f32 %v1480, %v1504
    %1506 = vmatmul.f32.gmra.mxu0 %v1485
    %v1507 = vpop.f32.mrf.mxu0
    %v1508 = vadd.f32 %v1480, %v1507
    %1509 = vdwg.mxu0
    %v1510 = vmul.f32 %v1505, %v1505
    %v1511 = vmul.f32 %v1508, %v1508
    %v1512 = vmul.f32 %v1505, %v1510
    %v1513 = vmul.f32 %v1508, %v1511
    %v1514 = vmul.f32 %v1512, 0.044715
    %v1515 = vmul.f32 %v1513, 0.044715
    %v1516 = vadd.f32 %v1505, %v1514
    %v1517 = vadd.f32 %v1508, %v1515
    %v1518 = vmul.f32 %v1516, 0.7978846
    %v1519 = vmul.f32 %v1517, 0.7978846
    %v1520 = vtanh.pop %v1518
    %v1521 = vtanh.pop %v1519
    %v1522 = vadd.f32 %v1520, 1.0
    %v1523 = vadd.f32 %v1521, 1.0
    %v1524 = vmul.f32 %v1522, 0.5
    %v1525 = vmul.f32 %v1523, 0.5
    %v1526 = vmul.f32 %v1505, %v1524
    %v1527 = vmul.f32 %v1508, %v1525
    %v1528 = vld [vmem:[%s925 + $0x20] sm:$0xff]
    %v1529 = vld [vmem:[%s925 + $0x28] sm:$0xff]
    %v1530 = vld [vmem:[%s925 + $0x30] sm:$0xff]
    %v1531 = vld [vmem:[%s925 + $0x38] sm:$0xff]
    %v1532 = vld [vmem:[%s925 + $0x40] sm:$0xff]
    %v1533 = vld [vmem:[%s925 + $0x48] sm:$0xff]
    %v1534 = vld [vmem:[%s925 + $0x50] sm:$0xff]
    %v1535 = vld [vmem:[%s925 + $0x58] sm:$0xff]
    %v1536 = vld [vmem:[%s930 + $0x5] sm:$0x1]
    %v1537 = vperm.slane %v1536, 0
    %1546 = vrot.lane.b32.xlu0 %v1528, 64
    %v1547 = vpop.permute.xlu0 %1546
    %1548 = vrot.lane.b32.xlu0 %v1529, 64
    %v1549 = vpop.permute.xlu0 %1548
    %1550 = vrot.lane.b32.xlu0 %v1530, 64
    %v1551 = vpop.permute.xlu0 %1550
    %1552 = vrot.lane.b32.xlu0 %v1531, 64
    %v1553 = vpop.permute.xlu0 %1552
    %1554 = vrot.lane.b32.xlu0 %v1532, 64
    %v1555 = vpop.permute.xlu0 %1554
    %1556 = vrot.lane.b32.xlu0 %v1533, 64
    %v1557 = vpop.permute.xlu0 %1556
    %1558 = vrot.lane.b32.xlu0 %v1534, 64
    %v1559 = vpop.permute.xlu0 %1558
    %1560 = vrot.lane.b32.xlu0 %v1535, 64
    %v1561 = vpop.permute.xlu0 %1560
    %v1571 = vsel %vm841, %v1526, 0
    %v1574 = vsel %vm841, %v1527, 0
    %1576 = vmatpush.msra.mxu0 0.0
    %1577 = vmatpush.msra.mxu0 0.0
    %1578 = vmatpush.msra.mxu0 0.0
    %1579 = vmatpush.msra.mxu0 0.0
    %1580 = vmatpush.msra.mxu0 0.0
    %1581 = vmatpush.msra.mxu0 0.0
    %1582 = vmatpush.msra.mxu0 0.0
    %1583 = vmatpush.msra.mxu0 0.0
    %1584 = vmatpush.msra.mxu0 %v1561
    %1585 = vmatpush.msra.mxu0 %v1559
    %1586 = vmatpush.msra.mxu0 %v1557
    %1587 = vmatpush.msra.mxu0 %v1555
    %1588 = vmatpush.msra.mxu0 %v1553
    %1589 = vmatpush.msra.mxu0 %v1551
    %1590 = vmatpush.msra.mxu0 %v1549
    %1591 = vmatpush.msra.mxu0 %v1547
    %1592 = vmatmul.f32.gmra.mxu0 %v1571
    %v1593 = vpop.f32.mrf.mxu0
    %v1594 = vadd.f32 %v1537, %v1593
    %1595 = vmatmul.f32.gmra.mxu0 %v1574
    %v1596 = vpop.f32.mrf.mxu0
    %v1597 = vadd.f32 %v1537, %v1596
    %1598 = vdwg.mxu0
    %v1599 = vadd.f32 %v1594, %v1473
    %v1600 = vadd.f32 %v1597, %v1474
    %v1601 = vld [vmem:[%s930 + $0x6] sm:$0x1]
    %v1602 = vld [vmem:[%s930 + $0x7] sm:$0x1]
    %v1603 = vsel %vm111, %v1599, 0.0
    %1604 = vadd.xlane.f32.xlu0 %v1603
    %v1605 = vpop.xlane.xlu0 %1604
    %v1606 = vsel %vm111, %v1600, 0.0
    %1607 = vadd.xlane.f32.xlu0 %v1606
    %v1608 = vpop.xlane.xlu0 %1607
    %v1609 = vmul.f32 %v1605, %v124
    %v1610 = vmul.f32 %v1608, %v124
    %v1611 = vsub.f32 %v1599, %v1609
    %v1612 = vsub.f32 %v1600, %v1610
    %v1613 = vmul.f32 %v1611, %v1611
    %v1614 = vmul.f32 %v1612, %v1612
    %v1615 = vsel %vm111, %v1613, 0.0
    %1616 = vadd.xlane.f32.xlu0 %v1615
    %v1617 = vpop.xlane.xlu0 %1616
    %v1618 = vsel %vm111, %v1614, 0.0
    %1619 = vadd.xlane.f32.xlu0 %v1618
    %v1620 = vpop.xlane.xlu0 %1619
    %v1621 = vmul.f32 %v1617, %v124
    %v1622 = vmul.f32 %v1620, %v124
    %v1623 = vadd.f32 %v1621, 1e-12
    %v1624 = vadd.f32 %v1622, 1e-12
    %v1625 = vrsqrt.pop %v1623
    %v1626 = vmul.f32 %v1625, %v1623
    %v1627 = vmul.f32 %v1626, %v1625
    %v1628 = vmul.f32 0.5, %v1627
    %v1629 = vsub.f32 1.5, %v1628
    %v1630 = vmul.f32 %v1625, %v1629
    %vm1631 = vweird.f32 %v1623
    %vm1632 = vweird.f32 %v1625
    %vm1633 = vmor %vm1631, %vm1632
    %v1634 = vsel %vm1633, %v1625, %v1630
    %v1635 = vrsqrt.pop %v1624
    %v1636 = vmul.f32 %v1635, %v1624
    %v1637 = vmul.f32 %v1636, %v1635
    %v1638 = vmul.f32 0.5, %v1637
    %v1639 = vsub.f32 1.5, %v1638
    %v1640 = vmul.f32 %v1635, %v1639
    %vm1641 = vweird.f32 %v1624
    %vm1642 = vweird.f32 %v1635
    %vm1643 = vmor %vm1641, %vm1642
    %v1644 = vsel %vm1643, %v1635, %v1640
    %v1645 = vmul.f32 %v1611, %v1634
    %v1646 = vmul.f32 %v1612, %v1644
    %v1647 = vperm.slane %v1601, 0
    %v1648 = vmul.f32 %v1645, %v1647
    %v1649 = vmul.f32 %v1646, %v1647
    %v1650 = vperm.slane %v1602, 0
    %v1651 = vadd.f32 %v1648, %v1650
    %v1652 = vadd.f32 %v1649, %v1650
    %v1653 = vld [vmem:[#allocation5] sm:$0xff]
    %v1654 = vld [vmem:[#allocation5 + $0x8] sm:$0xff]
    %v1655 = vld [vmem:[#allocation5 + $0x10] sm:$0xff]
    %v1656 = vld [vmem:[#allocation5 + $0x18] sm:$0xff]
    %v1657 = vld [vmem:[#allocation5 + $0x20] sm:$0x1]
    %v1658 = vperm.slane %v1657, 0
    %v1661 = vrot.slane %v1652, 7
    %vm1662 = vcmask 1041409
    %v1663 = vsel %vm1662, %v1661, %v1651
    %1668 = vrot.lane.b32.xlu0 %v1653, 96
    %v1669 = vpop.permute.xlu0 %1668
    %1670 = vrot.lane.b32.xlu0 %v1654, 96
    %v1671 = vpop.permute.xlu0 %1670
    %1672 = vrot.lane.b32.xlu0 %v1655, 96
    %v1673 = vpop.permute.xlu0 %1672
    %1674 = vrot.lane.b32.xlu0 %v1656, 96
    %v1675 = vpop.permute.xlu0 %1674
    %1681 = vrot.lane.b32.xlu0 %v1658, 96
    %v1682 = vpop.permute.xlu0 %1681
    %v1684 = vsel %vm111, %v1663, 0
    %1686 = vmatpush.msra.mxu0 0.0
    %1687 = vmatpush.msra.mxu0 0.0
    %1688 = vmatpush.msra.mxu0 0.0
    %1689 = vmatpush.msra.mxu0 0.0
    %1690 = vmatpush.msra.mxu0 0.0
    %1691 = vmatpush.msra.mxu0 0.0
    %1692 = vmatpush.msra.mxu0 0.0
    %1693 = vmatpush.msra.mxu0 0.0
    %1694 = vmatpush.msra.mxu0 0.0
    %1695 = vmatpush.msra.mxu0 0.0
    %1696 = vmatpush.msra.mxu0 0.0
    %1697 = vmatpush.msra.mxu0 0.0
    %1698 = vmatpush.msra.mxu0 %v1675
    %1699 = vmatpush.msra.mxu0 %v1673
    %1700 = vmatpush.msra.mxu0 %v1671
    %1701 = vmatpush.msra.mxu0 %v1669
    %1702 = vmatmul.f32.gmra.mxu0 %v1684
    %v1703 = vpop.f32.mrf.mxu0
    %v1704 = vadd.f32 %v1682, %v1703
    %1705 = vdwg.mxu0
    %v1706 = vmax.f32 %v1704, 0.0
    %v1707 = vld [vmem:[#allocation5 + $0x90] sm:$0xff]
    %v1708 = vld [vmem:[#allocation5 + $0x98] sm:$0xff]
    %v1709 = vld [vmem:[#allocation5 + $0xa0] sm:$0xff]
    %v1710 = vld [vmem:[#allocation5 + $0xa8] sm:$0xff]
    %v1711 = vld [vmem:[#allocation5 + $0xb0] sm:$0x1]
    %v1712 = vperm.slane %v1711, 0
    %v1714 = vsel %vm111, %v1706, 0
    %1716 = vmatpush.msra.mxu0 0.0
    %1717 = vmatpush.msra.mxu0 0.0
    %1718 = vmatpush.msra.mxu0 0.0
    %1719 = vmatpush.msra.mxu0 0.0
    %1720 = vmatpush.msra.mxu0 0.0
    %1721 = vmatpush.msra.mxu0 0.0
    %1722 = vmatpush.msra.mxu0 0.0
    %1723 = vmatpush.msra.mxu0 0.0
    %1724 = vmatpush.msra.mxu0 0.0
    %1725 = vmatpush.msra.mxu0 0.0
    %1726 = vmatpush.msra.mxu0 0.0
    %1727 = vmatpush.msra.mxu0 0.0
    %1728 = vmatpush.msra.mxu0 %v1710
    %1729 = vmatpush.msra.mxu0 %v1709
    %1730 = vmatpush.msra.mxu0 %v1708
    %1731 = vmatpush.msra.mxu0 %v1707
    %1732 = vmatmul.f32.gmra.mxu0 %v1714
    %v1733 = vpop.f32.mrf.mxu0
    %v1734 = vadd.f32 %v1712, %v1733
    %1735 = vdwg.mxu0
    %1736 = vst [vmem:[#allocation7] sm:$0x3] %v1734
    // Predicated region
    $region30: #{distilled_model_forward.1} parent=1 // pred_check
      _
    $region31: #{distilled_model_forward.1} parent=1 // pred_check_branch
      %1738 = sbr.rel (0) target = $region33
    $region32: #{distilled_model_forward.1} parent=1 // pred_region
      %1740 = vsyncadd [#allocation4], 0
      %s1742 = sshll.u32 [#allocation7], 4
      %s1743 = int_to_ptr.vmem [resolvable:$true] %s1742
      %s1744 = sshll.u32 %s5, 4
      %s1745 = int_to_ptr.hbm [resolvable:$true] %s1744
      %1747 = dma.vmem_to_hbm [thread:$0]  %s1743, 32, %s1745, [#allocation4]
    $region33: #{distilled_model_forward.1} parent=1 // pred_fallthru
      _
    // Predicated region
    $region34: #{distilled_model_forward.1} parent=1 // pred_check
      _
    $region35: #{distilled_model_forward.1} parent=1 // pred_check_branch
      %1749 = sbr.rel (0) target = $region37
    $region36: #{distilled_model_forward.1} parent=1 // pred_region
      %1751 = dma.done [#allocation4], 32
    $region37: #{distilled_model_forward.1} parent=1 // pred_fallthru
      _
    %1752 = vsyncpa [#allocation3], 1
    %1753 = vsyncpa [#allocation6], 1
    %1754 = vsyncpa [#allocation4], 1

</llo_original>
